<compile_context>
chip_gen: v5e
topology: v5e:2x2
jax: 0.10.0
libtpu: 0.0.40
codegen_flags: <defaults>
</compile_context>

<pallas_src>
import jax
import jax.numpy as jnp
from jax.experimental import pallas as pl
from jax.experimental.pallas import tpu as pltpu

LN_EPS = 1e-5
# Conservative scoped-VMEM cap valid on every generation
# (v7x: 64 MiB per TensorCore; v5e/v6e: 128 MiB).
VMEM_CAP_BYTES = 64 * 1024 * 1024


def _round_up(n, m):
    return ((n + m - 1) // m) * m


def ffn_kernel(x_ref, w1_ref, b1_ref, w2_ref, b2_ref, g_ref, beta_ref, o_ref):
    # x_ref: (tm, F), w1_ref: (F, H), b1_ref: (1, H),
    # w2_ref: (H, F), b2_ref/g_ref/beta_ref: (1, F), o_ref: (tm, F)

    # linear1 + ReLU (dropout1 == identity in eval mode). Operands stay in
    # their native dtype so bf16 runs at full MXU rate; accumulate in f32.
    h = jnp.dot(x_ref[...], w1_ref[...], preferred_element_type=jnp.float32)
    h = jnp.maximum(h + b1_ref[...].astype(jnp.float32), 0.0)

    # linear2 (dropout2 == identity). Cast the hidden activation back to the
    # weight dtype so the second matmul also uses native-rate MXU operands.
    y = jnp.dot(h.astype(w2_ref.dtype), w2_ref[...],
                preferred_element_type=jnp.float32)
    y = y + b2_ref[...].astype(jnp.float32)

    # LayerNorm over the feature (lane) axis, always in f32.
    mean = jnp.mean(y, axis=-1, keepdims=True)
    cent = y - mean
    var = jnp.mean(cent * cent, axis=-1, keepdims=True)
    yn = cent * jax.lax.rsqrt(var + LN_EPS)
    out = yn * g_ref[...].astype(jnp.float32) + beta_ref[...].astype(jnp.float32)
    o_ref[...] = out.astype(o_ref.dtype)


def _vmem_bytes(tm, F, H, x_itemsize, w_itemsize):
    weights = (F * H + H * F + H + 3 * F) * w_itemsize   # single-buffered constants
    io = 2 * 2 * tm * F * x_itemsize                     # double-buffered x/out tiles
    acts = tm * H * 4 + 2 * tm * F * 4                   # f32 intermediates (h, y, out)
    return weights + io + acts


def feedforward_pallas(x, w1, b1, w2, b2, gamma, beta, *, tm=256):
    """x: [N, F] rows x features. Returns [N, F] (eval-mode FeedForward+LN)."""
    N, F = x.shape
    H = w1.shape[1]

    # Row tile: multiple of 8 (sublane), capped by the row count and by a
    # conservative VMEM budget (resident weights + double-buffered row tiles).
    tm_eff = _round_up(min(int(tm), _round_up(N, 8)), 8)
    while tm_eff > 8 and _vmem_bytes(tm_eff, F, H, x.dtype.itemsize,
                                     w1.dtype.itemsize) > VMEM_CAP_BYTES:
        tm_eff = max(8, _round_up(tm_eff // 2, 8))

    # Pad rows so any N works at the MXU-efficient tile size (no assert).
    n_pad = _round_up(N, tm_eff)
    x_p = jnp.pad(x, ((0, n_pad - N), (0, 0))) if n_pad != N else x
    grid = (n_pad // tm_eff,)

    cost = pl.CostEstimate(
        flops=4 * n_pad * F * H,            # two matmuls
        transcendentals=n_pad,              # one rsqrt per row
        bytes_accessed=(2 * F * H + H + 3 * F) * w1.dtype.itemsize
                       + 2 * n_pad * F * x.dtype.itemsize,
    )
    vmem_limit = int(min(VMEM_CAP_BYTES,
                         max(32 * 1024 * 1024,
                             2 * _vmem_bytes(tm_eff, F, H, x.dtype.itemsize,
                                             w1.dtype.itemsize))))

    def build(single_buffer_weights):
        const_kw = (dict(pipeline_mode=pl.Buffered(1))
                    if single_buffer_weights else {})
        in_specs = [
            pl.BlockSpec((tm_eff, F), lambda i: (i, 0)),          # x rows
            pl.BlockSpec((F, H), lambda i: (0, 0), **const_kw),   # w1
            pl.BlockSpec((1, H), lambda i: (0, 0), **const_kw),   # b1
            pl.BlockSpec((H, F), lambda i: (0, 0), **const_kw),   # w2
            pl.BlockSpec((1, F), lambda i: (0, 0), **const_kw),   # b2
            pl.BlockSpec((1, F), lambda i: (0, 0), **const_kw),   # gamma
            pl.BlockSpec((1, F), lambda i: (0, 0), **const_kw),   # beta
        ]
        return pl.pallas_call(
            ffn_kernel,
            out_shape=jax.ShapeDtypeStruct((n_pad, F), x.dtype),
            grid_spec=pltpu.PrefetchScalarGridSpec(
                num_scalar_prefetch=0,
                grid=grid,
                in_specs=in_specs,
                out_specs=pl.BlockSpec((tm_eff, F), lambda i: (i, 0)),
            ),
            compiler_params=pltpu.CompilerParams(
                dimension_semantics=("parallel",),   # rows shard across TCs
                vmem_limit_bytes=vmem_limit,
            ),
            cost_estimate=cost,
        )

    try:
        out = build(True)(x_p, w1, b1, w2, b2, gamma, beta)
        jax.block_until_ready(out)
    except Exception:
        # Fallback for JAX versions without BlockSpec pipeline_mode support.
        out = build(False)(x_p, w1, b1, w2, b2, gamma, beta)

    return out[:N]


def feedforward_ref(x, w1, b1, w2, b2, gamma, beta):
    """Plain-JAX reference mirroring the kernel's dtype handling."""
    h = jnp.dot(x, w1, preferred_element_type=jnp.float32)
    h = jnp.maximum(h + b1.astype(jnp.float32), 0.0)
    y = jnp.dot(h.astype(w2.dtype), w2, preferred_element_type=jnp.float32)
    y = y + b2.astype(jnp.float32)
    mu = y.mean(-1, keepdims=True)
    var = ((y - mu) ** 2).mean(-1, keepdims=True)
    out = (y - mu) * jax.lax.rsqrt(var + LN_EPS)
    out = out * gamma.astype(jnp.float32) + beta.astype(jnp.float32)
    return out.astype(x.dtype)


def init_params(key, n_feature, n_hidden, dtype=jnp.float32):
    """Deterministic init mirroring nn.Linear's uniform(-1/sqrt(fan_in), +)."""
    k1, k2, k3, k4 = jax.random.split(key, 4)
    lim1 = 1.0 / float(n_feature) ** 0.5
    lim2 = 1.0 / float(n_hidden) ** 0.5
    # weights stored already transposed for y = x @ W
    w1 = jax.random.uniform(k1, (n_feature, n_hidden), jnp.float32, -lim1, lim1)
    b1 = jax.random.uniform(k2, (1, n_hidden), jnp.float32, -lim1, lim1)
    w2 = jax.random.uniform(k3, (n_hidden, n_feature), jnp.float32, -lim2, lim2)
    b2 = jax.random.uniform(k4, (1, n_feature), jnp.float32, -lim2, lim2)
    gamma = jnp.ones((1, n_feature), jnp.float32)   # LayerNorm weight
    beta = jnp.zeros((1, n_feature), jnp.float32)   # LayerNorm bias
    return tuple(p.astype(dtype) for p in (w1, b1, w2, b2, gamma, beta))


if __name__ == "__main__":
    key = jax.random.PRNGKey(0)
    kx, kp, kx2, kp2 = jax.random.split(key, 4)

    # Small shapes consistent with the module; 256-aligned feature/hidden dims.
    batch, seq, n_feature, n_hidden = 2, 8, 256, 256

    # --- f32 check ---
    x = jax.random.normal(kx, (batch, seq, n_feature), jnp.float32)
    params = init_params(kp, n_feature, n_hidden, jnp.float32)
    x2d = x.reshape(batch * seq, n_feature)
    out2d = feedforward_pallas(x2d, *params)
    out = out2d.reshape(batch, seq, n_feature)
    jax.block_until_ready(out)
    ref = feedforward_ref(x2d, *params).reshape(batch, seq, n_feature)
    assert jnp.allclose(out, ref, atol=1e-3, rtol=1e-3), "f32 mismatch"

    # --- bf16 check with a row count not divisible by 8 (exercises padding) ---
    batch_b, seq_b = 3, 5   # N = 15 rows -> padded to 16 inside the wrapper
    xb = jax.random.normal(kx2, (batch_b, seq_b, n_feature),
                           jnp.float32).astype(jnp.bfloat16)
    params_b = init_params(kp2, n_feature, n_hidden, jnp.bfloat16)
    xb2d = xb.reshape(batch_b * seq_b, n_feature)
    outb = feedforward_pallas(xb2d, *params_b)
    jax.block_until_ready(outb)
    refb = feedforward_ref(xb2d, *params_b)
    err = jnp.max(jnp.abs(outb.astype(jnp.float32) - refb.astype(jnp.float32)))
    assert float(err) < 5e-2, f"bf16 mismatch: {err}"

    print("KERNEL_OK")
</pallas_src>

<mosaic_0001>
module attributes {stable_mosaic.version = 11 : i64} {
  func.func @ffn_kernel(%arg0: i32, %arg1: memref<16x256xf32, #tpu.memory_space<vmem>>, %arg2: memref<256x256xf32, #tpu.memory_space<vmem>>, %arg3: memref<1x256xf32, #tpu.memory_space<vmem>>, %arg4: memref<256x256xf32, #tpu.memory_space<vmem>>, %arg5: memref<1x256xf32, #tpu.memory_space<vmem>>, %arg6: memref<1x256xf32, #tpu.memory_space<vmem>>, %arg7: memref<1x256xf32, #tpu.memory_space<vmem>>, %arg8: memref<16x256xf32, #tpu.memory_space<vmem>>) attributes {dimension_semantics = [#tpu.dimension_semantics<parallel>], iteration_bounds = array<i64: 1>, scalar_prefetch = 0 : i64, scratch_operands = 0 : i64, tpu.core_type = #tpu.core_type<tc>, window_params = [{transform_indices = @transform_0, window_bounds = array<i64: 16, 256>}, {pipeline_mode = #tpu.pipeline_mode<synchronous>, transform_indices = @transform_1, window_bounds = array<i64: 256, 256>}, {pipeline_mode = #tpu.pipeline_mode<synchronous>, transform_indices = @transform_2, window_bounds = array<i64: 1, 256>}, {pipeline_mode = #tpu.pipeline_mode<synchronous>, transform_indices = @transform_3, window_bounds = array<i64: 256, 256>}, {pipeline_mode = #tpu.pipeline_mode<synchronous>, transform_indices = @transform_4, window_bounds = array<i64: 1, 256>}, {pipeline_mode = #tpu.pipeline_mode<synchronous>, transform_indices = @transform_5, window_bounds = array<i64: 1, 256>}, {pipeline_mode = #tpu.pipeline_mode<synchronous>, transform_indices = @transform_6, window_bounds = array<i64: 1, 256>}, {transform_indices = @transform_7, window_bounds = array<i64: 16, 256>}]} {
    %c0 = arith.constant 0 : index
    %c0_0 = arith.constant 0 : index
    %0 = vector.load %arg1[%c0, %c0_0] : memref<16x256xf32, #tpu.memory_space<vmem>>, vector<16x256xf32>
    %c0_1 = arith.constant 0 : index
    %c0_2 = arith.constant 0 : index
    %1 = vector.load %arg2[%c0_1, %c0_2] : memref<256x256xf32, #tpu.memory_space<vmem>>, vector<256x256xf32>
    %cst = arith.constant dense<0.000000e+00> : vector<16x256xf32>
    %2 = tpu.matmul %0, %1, %cst {dimension_numbers = #tpu.dot_dimension_numbers<[1], [0], [0], [1], [0, 0, 1, 1], [], []>} : vector<16x256xf32>, vector<256x256xf32>, vector<16x256xf32> -> vector<16x256xf32>
    %c0_3 = arith.constant 0 : index
    %c0_4 = arith.constant 0 : index
    %3 = vector.load %arg3[%c0_3, %c0_4] : memref<1x256xf32, #tpu.memory_space<vmem>>, vector<1x256xf32>
    %4 = vector.broadcast %3 : vector<1x256xf32> to vector<16x256xf32>
    %5 = arith.addf %2, %4 : vector<16x256xf32>
    %cst_5 = arith.constant 0.000000e+00 : f32
    %6 = vector.broadcast %cst_5 : f32 to vector<16x256xf32>
    %7 = arith.maximumf %5, %6 : vector<16x256xf32>
    %c0_6 = arith.constant 0 : index
    %c0_7 = arith.constant 0 : index
    %8 = vector.load %arg4[%c0_6, %c0_7] : memref<256x256xf32, #tpu.memory_space<vmem>>, vector<256x256xf32>
    %cst_8 = arith.constant dense<0.000000e+00> : vector<16x256xf32>
    %9 = tpu.matmul %7, %8, %cst_8 {dimension_numbers = #tpu.dot_dimension_numbers<[1], [0], [0], [1], [0, 0, 1, 1], [], []>} : vector<16x256xf32>, vector<256x256xf32>, vector<16x256xf32> -> vector<16x256xf32>
    %c0_9 = arith.constant 0 : index
    %c0_10 = arith.constant 0 : index
    %10 = vector.load %arg5[%c0_9, %c0_10] : memref<1x256xf32, #tpu.memory_space<vmem>>, vector<1x256xf32>
    %11 = vector.broadcast %10 : vector<1x256xf32> to vector<16x256xf32>
    %12 = arith.addf %9, %11 : vector<16x256xf32>
    %cst_11 = arith.constant dense<0.000000e+00> : vector<16xf32>
    %13 = vector.multi_reduction <add>, %12, %cst_11 [1] : vector<16x256xf32> to vector<16xf32>
    %14 = vector.shape_cast %13 : vector<16xf32> to vector<16x1xf32>
    %cst_12 = arith.constant 2.560000e+02 : f32
    %15 = vector.broadcast %cst_12 : f32 to vector<16x1xf32>
    %16 = arith.divf %14, %15 : vector<16x1xf32>
    %17 = vector.broadcast %16 : vector<16x1xf32> to vector<16x256xf32>
    %18 = arith.subf %12, %17 : vector<16x256xf32>
    %19 = arith.mulf %18, %18 : vector<16x256xf32>
    %cst_13 = arith.constant dense<0.000000e+00> : vector<16xf32>
    %20 = vector.multi_reduction <add>, %19, %cst_13 [1] : vector<16x256xf32> to vector<16xf32>
    %21 = vector.shape_cast %20 : vector<16xf32> to vector<16x1xf32>
    %cst_14 = arith.constant 2.560000e+02 : f32
    %22 = vector.broadcast %cst_14 : f32 to vector<16x1xf32>
    %23 = arith.divf %21, %22 : vector<16x1xf32>
    %cst_15 = arith.constant 9.99999974E-6 : f32
    %24 = vector.broadcast %cst_15 : f32 to vector<16x1xf32>
    %25 = arith.addf %23, %24 : vector<16x1xf32>
    %26 = math.rsqrt %25 : vector<16x1xf32>
    %27 = vector.broadcast %26 : vector<16x1xf32> to vector<16x256xf32>
    %28 = arith.mulf %18, %27 : vector<16x256xf32>
    %c0_16 = arith.constant 0 : index
    %c0_17 = arith.constant 0 : index
    %29 = vector.load %arg6[%c0_16, %c0_17] : memref<1x256xf32, #tpu.memory_space<vmem>>, vector<1x256xf32>
    %30 = vector.broadcast %29 : vector<1x256xf32> to vector<16x256xf32>
    %31 = arith.mulf %28, %30 : vector<16x256xf32>
    %c0_18 = arith.constant 0 : index
    %c0_19 = arith.constant 0 : index
    %32 = vector.load %arg7[%c0_18, %c0_19] : memref<1x256xf32, #tpu.memory_space<vmem>>, vector<1x256xf32>
    %33 = vector.broadcast %32 : vector<1x256xf32> to vector<16x256xf32>
    %34 = arith.addf %31, %33 : vector<16x256xf32>
    %c0_20 = arith.constant 0 : index
    %c0_21 = arith.constant 0 : index
    %35 = vector.load %arg8[%c0_20, %c0_21] : memref<16x256xf32, #tpu.memory_space<vmem>>, vector<16x256xf32>
    tpu.vector_store %arg8[%c0_20, %c0_21], %34 {strides = array<i32>} : memref<16x256xf32, #tpu.memory_space<vmem>>, vector<16x256xf32>,
    return
  }
  func.func @transform_0(%arg0: i32) -> (i32, i32) {
    %c0_i32 = arith.constant 0 : i32
    %c0_i32_0 = arith.constant 0 : i32
    return %arg0, %c0_i32 : i32, i32
  }
  func.func @transform_1(%arg0: i32) -> (i32, i32) {
    %c0_i32 = arith.constant 0 : i32
    %c0_i32_0 = arith.constant 0 : i32
    %c0_i32_1 = arith.constant 0 : i32
    return %c0_i32, %c0_i32_0 : i32, i32
  }
  func.func @transform_2(%arg0: i32) -> (i32, i32) {
    %c0_i32 = arith.constant 0 : i32
    %c0_i32_0 = arith.constant 0 : i32
    %c0_i32_1 = arith.constant 0 : i32
    return %c0_i32, %c0_i32_0 : i32, i32
  }
  func.func @transform_3(%arg0: i32) -> (i32, i32) {
    %c0_i32 = arith.constant 0 : i32
    %c0_i32_0 = arith.constant 0 : i32
    %c0_i32_1 = arith.constant 0 : i32
    return %c0_i32, %c0_i32_0 : i32, i32
  }
  func.func @transform_4(%arg0: i32) -> (i32, i32) {
    %c0_i32 = arith.constant 0 : i32
    %c0_i32_0 = arith.constant 0 : i32
    %c0_i32_1 = arith.constant 0 : i32
    return %c0_i32, %c0_i32_0 : i32, i32
  }
  func.func @transform_5(%arg0: i32) -> (i32, i32) {
    %c0_i32 = arith.constant 0 : i32
    %c0_i32_0 = arith.constant 0 : i32
    %c0_i32_1 = arith.constant 0 : i32
    return %c0_i32, %c0_i32_0 : i32, i32
  }
  func.func @transform_6(%arg0: i32) -> (i32, i32) {
    %c0_i32 = arith.constant 0 : i32
    %c0_i32_0 = arith.constant 0 : i32
    %c0_i32_1 = arith.constant 0 : i32
    return %c0_i32, %c0_i32_0 : i32, i32
  }
  func.func @transform_7(%arg0: i32) -> (i32, i32) {
    %c0_i32 = arith.constant 0 : i32
    %c0_i32_0 = arith.constant 0 : i32
    return %arg0, %c0_i32 : i32, i32
  }
}

module attributes {stable_mosaic.version = 11 : i64} {
  func.func @ffn_kernel(%arg0: i32, %arg1: memref<16x256xf32, #tpu.memory_space<vmem>>, %arg2: memref<256x256xf32, #tpu.memory_space<vmem>>, %arg3: memref<1x256xf32, #tpu.memory_space<vmem>>, %arg4: memref<256x256xf32, #tpu.memory_space<vmem>>, %arg5: memref<1x256xf32, #tpu.memory_space<vmem>>, %arg6: memref<1x256xf32, #tpu.memory_space<vmem>>, %arg7: memref<1x256xf32, #tpu.memory_space<vmem>>, %arg8: memref<16x256xf32, #tpu.memory_space<vmem>>) attributes {dimension_semantics = [#tpu.dimension_semantics<parallel>], iteration_bounds = array<i64: 1>, scalar_prefetch = 0 : i64, scratch_operands = 0 : i64, tpu.core_type = #tpu.core_type<tc>, window_params = [{transform_indices = @transform_0, window_bounds = array<i64: 16, 256>}, {pipeline_mode = #tpu.pipeline_mode<synchronous>, transform_indices = @transform_1, window_bounds = array<i64: 256, 256>}, {pipeline_mode = #tpu.pipeline_mode<synchronous>, transform_indices = @transform_2, window_bounds = array<i64: 1, 256>}, {pipeline_mode = #tpu.pipeline_mode<synchronous>, transform_indices = @transform_3, window_bounds = array<i64: 256, 256>}, {pipeline_mode = #tpu.pipeline_mode<synchronous>, transform_indices = @transform_4, window_bounds = array<i64: 1, 256>}, {pipeline_mode = #tpu.pipeline_mode<synchronous>, transform_indices = @transform_5, window_bounds = array<i64: 1, 256>}, {pipeline_mode = #tpu.pipeline_mode<synchronous>, transform_indices = @transform_6, window_bounds = array<i64: 1, 256>}, {transform_indices = @transform_7, window_bounds = array<i64: 16, 256>}]} {
    %c0 = arith.constant 0 : index
    %c0_0 = arith.constant 0 : index
    %0 = vector.load %arg1[%c0, %c0_0] : memref<16x256xf32, #tpu.memory_space<vmem>>, vector<16x256xf32>
    %c0_1 = arith.constant 0 : index
    %c0_2 = arith.constant 0 : index
    %1 = vector.load %arg2[%c0_1, %c0_2] : memref<256x256xf32, #tpu.memory_space<vmem>>, vector<256x256xf32>
    %cst = arith.constant dense<0.000000e+00> : vector<16x256xf32>
    %2 = tpu.matmul %0, %1, %cst {dimension_numbers = #tpu.dot_dimension_numbers<[1], [0], [0], [1], [0, 0, 1, 1], [], []>} : vector<16x256xf32>, vector<256x256xf32>, vector<16x256xf32> -> vector<16x256xf32>
    %c0_3 = arith.constant 0 : index
    %c0_4 = arith.constant 0 : index
    %3 = vector.load %arg3[%c0_3, %c0_4] : memref<1x256xf32, #tpu.memory_space<vmem>>, vector<1x256xf32>
    %4 = vector.broadcast %3 : vector<1x256xf32> to vector<16x256xf32>
    %5 = arith.addf %2, %4 : vector<16x256xf32>
    %cst_5 = arith.constant 0.000000e+00 : f32
    %6 = vector.broadcast %cst_5 : f32 to vector<16x256xf32>
    %7 = arith.maximumf %5, %6 : vector<16x256xf32>
    %c0_6 = arith.constant 0 : index
    %c0_7 = arith.constant 0 : index
    %8 = vector.load %arg4[%c0_6, %c0_7] : memref<256x256xf32, #tpu.memory_space<vmem>>, vector<256x256xf32>
    %cst_8 = arith.constant dense<0.000000e+00> : vector<16x256xf32>
    %9 = tpu.matmul %7, %8, %cst_8 {dimension_numbers = #tpu.dot_dimension_numbers<[1], [0], [0], [1], [0, 0, 1, 1], [], []>} : vector<16x256xf32>, vector<256x256xf32>, vector<16x256xf32> -> vector<16x256xf32>
    %c0_9 = arith.constant 0 : index
    %c0_10 = arith.constant 0 : index
    %10 = vector.load %arg5[%c0_9, %c0_10] : memref<1x256xf32, #tpu.memory_space<vmem>>, vector<1x256xf32>
    %11 = vector.broadcast %10 : vector<1x256xf32> to vector<16x256xf32>
    %12 = arith.addf %9, %11 : vector<16x256xf32>
    %cst_11 = arith.constant dense<0.000000e+00> : vector<16xf32>
    %13 = vector.multi_reduction <add>, %12, %cst_11 [1] : vector<16x256xf32> to vector<16xf32>
    %14 = vector.shape_cast %13 : vector<16xf32> to vector<16x1xf32>
    %cst_12 = arith.constant 2.560000e+02 : f32
    %15 = vector.broadcast %cst_12 : f32 to vector<16x1xf32>
    %16 = arith.divf %14, %15 : vector<16x1xf32>
    %17 = vector.broadcast %16 : vector<16x1xf32> to vector<16x256xf32>
    %18 = arith.subf %12, %17 : vector<16x256xf32>
    %19 = arith.mulf %18, %18 : vector<16x256xf32>
    %cst_13 = arith.constant dense<0.000000e+00> : vector<16xf32>
    %20 = vector.multi_reduction <add>, %19, %cst_13 [1] : vector<16x256xf32> to vector<16xf32>
    %21 = vector.shape_cast %20 : vector<16xf32> to vector<16x1xf32>
    %cst_14 = arith.constant 2.560000e+02 : f32
    %22 = vector.broadcast %cst_14 : f32 to vector<16x1xf32>
    %23 = arith.divf %21, %22 : vector<16x1xf32>
    %cst_15 = arith.constant 9.99999974E-6 : f32
    %24 = vector.broadcast %cst_15 : f32 to vector<16x1xf32>
    %25 = arith.addf %23, %24 : vector<16x1xf32>
    %26 = math.rsqrt %25 : vector<16x1xf32>
    %27 = vector.broadcast %26 : vector<16x1xf32> to vector<16x256xf32>
    %28 = arith.mulf %18, %27 : vector<16x256xf32>
    %c0_16 = arith.constant 0 : index
    %c0_17 = arith.constant 0 : index
    %29 = vector.load %arg6[%c0_16, %c0_17] : memref<1x256xf32, #tpu.memory_space<vmem>>, vector<1x256xf32>
    %30 = vector.broadcast %29 : vector<1x256xf32> to vector<16x256xf32>
    %31 = arith.mulf %28, %30 : vector<16x256xf32>
    %c0_18 = arith.constant 0 : index
    %c0_19 = arith.constant 0 : index
    %32 = vector.load %arg7[%c0_18, %c0_19] : memref<1x256xf32, #tpu.memory_space<vmem>>, vector<1x256xf32>
    %33 = vector.broadcast %32 : vector<1x256xf32> to vector<16x256xf32>
    %34 = arith.addf %31, %33 : vector<16x256xf32>
    %c0_20 = arith.constant 0 : index
    %c0_21 = arith.constant 0 : index
    %35 = vector.load %arg8[%c0_20, %c0_21] : memref<16x256xf32, #tpu.memory_space<vmem>>, vector<16x256xf32>
    tpu.vector_store %arg8[%c0_20, %c0_21], %34 {strides = array<i32>} : memref<16x256xf32, #tpu.memory_space<vmem>>, vector<16x256xf32>,
    return
  }
  func.func @transform_0(%arg0: i32) -> (i32, i32) {
    %c0_i32 = arith.constant 0 : i32
    %c0_i32_0 = arith.constant 0 : i32
    return %arg0, %c0_i32 : i32, i32
  }
  func.func @transform_1(%arg0: i32) -> (i32, i32) {
    %c0_i32 = arith.constant 0 : i32
    %c0_i32_0 = arith.constant 0 : i32
    %c0_i32_1 = arith.constant 0 : i32
    return %c0_i32, %c0_i32_0 : i32, i32
  }
  func.func @transform_2(%arg0: i32) -> (i32, i32) {
    %c0_i32 = arith.constant 0 : i32
    %c0_i32_0 = arith.constant 0 : i32
    %c0_i32_1 = arith.constant 0 : i32
    return %c0_i32, %c0_i32_0 : i32, i32
  }
  func.func @transform_3(%arg0: i32) -> (i32, i32) {
    %c0_i32 = arith.constant 0 : i32
    %c0_i32_0 = arith.constant 0 : i32
    %c0_i32_1 = arith.constant 0 : i32
    return %c0_i32, %c0_i32_0 : i32, i32
  }
  func.func @transform_4(%arg0: i32) -> (i32, i32) {
    %c0_i32 = arith.constant 0 : i32
    %c0_i32_0 = arith.constant 0 : i32
    %c0_i32_1 = arith.constant 0 : i32
    return %c0_i32, %c0_i32_0 : i32, i32
  }
  func.func @transform_5(%arg0: i32) -> (i32, i32) {
    %c0_i32 = arith.constant 0 : i32
    %c0_i32_0 = arith.constant 0 : i32
    %c0_i32_1 = arith.constant 0 : i32
    return %c0_i32, %c0_i32_0 : i32, i32
  }
  func.func @transform_6(%arg0: i32) -> (i32, i32) {
    %c0_i32 = arith.constant 0 : i32
    %c0_i32_0 = arith.constant 0 : i32
    %c0_i32_1 = arith.constant 0 : i32
    return %c0_i32, %c0_i32_0 : i32, i32
  }
  func.func @transform_7(%arg0: i32) -> (i32, i32) {
    %c0_i32 = arith.constant 0 : i32
    %c0_i32_0 = arith.constant 0 : i32
    return %arg0, %c0_i32 : i32, i32
  }
}

</mosaic_0001>

<llo_original>
// kernel: tpu_custom_call.1
$region0: #{tpu_custom_call.1}
  #allocation0 [shape = 'u32[]', space=smem, size = 0x4, offset = 0x4, fixed_abs, tag = 'smem constant byte address 0x4 - core index']
  #allocation1 [shape = 'u32[72,128]{1,0:T(1,128)}', space=vmem, size = 0x9000, scoped, tag = 'internal scratch']
  %s0 = inlined_call_operand.hbm [shape: f32[16,256], index: 0, kind: input, shape index: {}]
  %s1 = inlined_call_operand.hbm [shape: f32[256,256], index: 1, kind: input, shape index: {}]
  %s2 = inlined_call_operand.hbm [shape: f32[1,256], index: 2, kind: input, shape index: {}]
  %s3 = inlined_call_operand.hbm [shape: f32[256,256], index: 3, kind: input, shape index: {}]
  %s4 = inlined_call_operand.vmem [shape: f32[1,256], index: 4, kind: input, shape index: {}]
  %s5 = inlined_call_operand.vmem [shape: f32[1,256], index: 5, kind: input, shape index: {}]
  %s6 = inlined_call_operand.hbm [shape: f32[1,256], index: 6, kind: input, shape index: {}]
  %s7 = inlined_call_operand.hbm [shape: f32[16,256], index: 7, kind: output, shape index: {}]
  %s8 = sld [smem:[#allocation0]]
  $region58: #{tpu_custom_call.1} parent=0
    _
  %s10 = ssub.s32 1, %s8
  %s11 = scalar_select 0, %s10, %s8
  $region1: #{tpu_custom_call.1} parent=0
    #allocation2 [shape = 'u8[16384]{0}', space=vmem, size = 0x4000, scoped, tag = 'input window, operand 0, single buffered']
    #allocation3 [shape = 's32[1]{0}', space=sflag, size = 0x4, scoped, tag = 'scoped memory for tpu_custom_call.1']
    #allocation4 [shape = 's32[1]{0}', space=sflag, size = 0x4, scoped, tag = 'scoped memory for tpu_custom_call.1']
    #allocation5 [shape = 'u8[262144]{0}', space=vmem, size = 0x40000, scoped, tag = 'input window, operand 1, single buffered']
    #allocation6 [shape = 's32[1]{0}', space=sflag, size = 0x4, scoped, tag = 'scoped memory for tpu_custom_call.1']
    #allocation7 [shape = 'u8[1024]{0}', space=vmem, size = 0x400, scoped, tag = 'input window, operand 2, single buffered']
    #allocation8 [shape = 'u8[262144]{0}', space=vmem, size = 0x40000, scoped, tag = 'input window, operand 3, single buffered']
    #allocation9 [shape = 's32[1]{0}', space=sflag, size = 0x4, scoped, tag = 'scoped memory for tpu_custom_call.1']
    #allocation10 [shape = 'u8[1024]{0}', space=vmem, size = 0x400, scoped, tag = 'input window, operand 6, single buffered']
    #allocation11 [shape = 'u8[16384]{0}', space=vmem, size = 0x4000, scoped, tag = 'output window, operand 0, single buffered']
    %12 = vsyncpa [#allocation3], 0
    %13 = vsyncpa [#allocation6], 0
    %14 = vsyncpa [#allocation9], 0
    %15 = vsyncpa [#allocation4], 0
    // Predicated region
    $region2: #{tpu_custom_call.1} parent=1 // pred_check
      _
    $region3: #{tpu_custom_call.1} parent=1 // pred_check_branch
      %17 = sbr.rel (0) target = $region5
    $region4: #{tpu_custom_call.1} parent=1 // pred_region
      %19 = vsyncadd [#allocation3], 0
      %s20 = sshll.u32 %s0, 4
      %s21 = int_to_ptr.hbm [resolvable:$true] %s20
      %s22 = sshll.u32 [#allocation2], 4
      %s23 = int_to_ptr.vmem [resolvable:$true] %s22
      %28 = dma.hbm_to_vmem [thread:$0]  %s21, 512, %s23, [#allocation3], 256, 256, 16
    $region5: #{tpu_custom_call.1} parent=1 // pred_fallthru
      _
    // Predicated region
    $region6: #{tpu_custom_call.1} parent=1 // pred_check
      _
    $region7: #{tpu_custom_call.1} parent=1 // pred_check_branch
      %30 = sbr.rel (0) target = $region9
    $region8: #{tpu_custom_call.1} parent=1 // pred_region
      %32 = vsyncadd [#allocation6], 0
      %s33 = sshll.u32 %s1, 4
      %s34 = int_to_ptr.hbm [resolvable:$true] %s33
      %s35 = sshll.u32 [#allocation5], 4
      %s36 = int_to_ptr.vmem [resolvable:$true] %s35
      %41 = dma.hbm_to_vmem [thread:$0]  %s34, 8192, %s36, [#allocation6], 256, 256, 16
    $region9: #{tpu_custom_call.1} parent=1 // pred_fallthru
      _
    // Predicated region
    $region10: #{tpu_custom_call.1} parent=1 // pred_check
      _
    $region11: #{tpu_custom_call.1} parent=1 // pred_check_branch
      %43 = sbr.rel (0) target = $region13
    $region12: #{tpu_custom_call.1} parent=1 // pred_region
      %45 = vsyncadd [#allocation6], 0
      %s47 = sshll.u32 %s2, 4
      %s48 = int_to_ptr.hbm [resolvable:$true] %s47
      %s49 = sshll.u32 [#allocation7], 4
      %s50 = int_to_ptr.vmem [resolvable:$true] %s49
      %52 = dma.hbm_to_vmem [thread:$0]  %s48, 32, %s50, [#allocation6]
    $region13: #{tpu_custom_call.1} parent=1 // pred_fallthru
      _
    // Predicated region
    $region14: #{tpu_custom_call.1} parent=1 // pred_check
      _
    $region15: #{tpu_custom_call.1} parent=1 // pred_check_branch
      %54 = sbr.rel (0) target = $region17
    $region16: #{tpu_custom_call.1} parent=1 // pred_region
      %56 = vsyncadd [#allocation9], 0
      %s57 = sshll.u32 %s3, 4
      %s58 = int_to_ptr.hbm [resolvable:$true] %s57
      %s59 = sshll.u32 [#allocation8], 4
      %s60 = int_to_ptr.vmem [resolvable:$true] %s59
      %65 = dma.hbm_to_vmem [thread:$0]  %s58, 8192, %s60, [#allocation9], 256, 256, 16
    $region17: #{tpu_custom_call.1} parent=1 // pred_fallthru
      _
    // Predicated region
    $region18: #{tpu_custom_call.1} parent=1 // pred_check
      _
    $region19: #{tpu_custom_call.1} parent=1 // pred_check_branch
      %67 = sbr.rel (0) target = $region21
    $region20: #{tpu_custom_call.1} parent=1 // pred_region
      _
    $region21: #{tpu_custom_call.1} parent=1 // pred_fallthru
      _
    // Predicated region
    $region22: #{tpu_custom_call.1} parent=1 // pred_check
      _
    $region23: #{tpu_custom_call.1} parent=1 // pred_check_branch
      %69 = sbr.rel (0) target = $region25
    $region24: #{tpu_custom_call.1} parent=1 // pred_region
      _
    $region25: #{tpu_custom_call.1} parent=1 // pred_fallthru
      _
    // Predicated region
    $region26: #{tpu_custom_call.1} parent=1 // pred_check
      _
    $region27: #{tpu_custom_call.1} parent=1 // pred_check_branch
      %71 = sbr.rel (0) target = $region29
    $region28: #{tpu_custom_call.1} parent=1 // pred_region
      %73 = vsyncadd [#allocation9], 0
      %s75 = sshll.u32 %s6, 4
      %s76 = int_to_ptr.hbm [resolvable:$true] %s75
      %s77 = sshll.u32 [#allocation10], 4
      %s78 = int_to_ptr.vmem [resolvable:$true] %s77
      %80 = dma.hbm_to_vmem [thread:$0]  %s76, 32, %s78, [#allocation9]
    $region29: #{tpu_custom_call.1} parent=1 // pred_fallthru
      _
    // Predicated region
    $region30: #{tpu_custom_call.1} parent=1 // pred_check
      _
    $region31: #{tpu_custom_call.1} parent=1 // pred_check_branch
      %82 = sbr.rel (0) target = $region33
    $region32: #{tpu_custom_call.1} parent=1 // pred_region
      %84 = dma.done [#allocation3], 512
    $region33: #{tpu_custom_call.1} parent=1 // pred_fallthru
      _
    // Predicated region
    $region34: #{tpu_custom_call.1} parent=1 // pred_check
      _
    $region35: #{tpu_custom_call.1} parent=1 // pred_check_branch
      %86 = sbr.rel (0) target = $region37
    $region36: #{tpu_custom_call.1} parent=1 // pred_region
      %88 = dma.done [#allocation6], 8192
    $region37: #{tpu_custom_call.1} parent=1 // pred_fallthru
      _
    // Predicated region
    $region38: #{tpu_custom_call.1} parent=1 // pred_check
      _
    $region39: #{tpu_custom_call.1} parent=1 // pred_check_branch
      %90 = sbr.rel (0) target = $region41
    $region40: #{tpu_custom_call.1} parent=1 // pred_region
      %92 = dma.done [#allocation6], 32
    $region41: #{tpu_custom_call.1} parent=1 // pred_fallthru
      _
    // Predicated region
    $region42: #{tpu_custom_call.1} parent=1 // pred_check
      _
    $region43: #{tpu_custom_call.1} parent=1 // pred_check_branch
      %94 = sbr.rel (0) target = $region45
    $region44: #{tpu_custom_call.1} parent=1 // pred_region
      %96 = dma.done [#allocation9], 8192
    $region45: #{tpu_custom_call.1} parent=1 // pred_fallthru
      _
    // Predicated region
    $region46: #{tpu_custom_call.1} parent=1 // pred_check
      _
    $region47: #{tpu_custom_call.1} parent=1 // pred_check_branch
      %98 = sbr.rel (0) target = $region49
    $region48: #{tpu_custom_call.1} parent=1 // pred_region
      %100 = dma.done [#allocation9], 32
    $region49: #{tpu_custom_call.1} parent=1 // pred_fallthru
      _
    %v101 = vld [vmem:[#allocation2] sm:$0xff]
    %v102 = vld [vmem:[#allocation2 + $0x8] sm:$0xff]
    %v103 = vld [vmem:[#allocation2 + $0x10] sm:$0xff]
    %v104 = vld [vmem:[#allocation2 + $0x18] sm:$0xff]
    %v105 = vld [vmem:[#allocation5] sm:$0xff]
    %v106 = vld [vmem:[#allocation5 + $0x8] sm:$0xff]
    %v107 = vld [vmem:[#allocation5 + $0x10] sm:$0xff]
    %v108 = vld [vmem:[#allocation5 + $0x18] sm:$0xff]
    %v109 = vld [vmem:[#allocation5 + $0x20] sm:$0xff]
    %v110 = vld [vmem:[#allocation5 + $0x28] sm:$0xff]
    %v111 = vld [vmem:[#allocation5 + $0x30] sm:$0xff]
    %v112 = vld [vmem:[#allocation5 + $0x38] sm:$0xff]
    %v113 = vld [vmem:[#allocation5 + $0x40] sm:$0xff]
    %v114 = vld [vmem:[#allocation5 + $0x48] sm:$0xff]
    %v115 = vld [vmem:[#allocation5 + $0x50] sm:$0xff]
    %v116 = vld [vmem:[#allocation5 + $0x58] sm:$0xff]
    %v117 = vld [vmem:[#allocation5 + $0x60] sm:$0xff]
    %v118 = vld [vmem:[#allocation5 + $0x68] sm:$0xff]
    %v119 = vld [vmem:[#allocation5 + $0x70] sm:$0xff]
    %v120 = vld [vmem:[#allocation5 + $0x78] sm:$0xff]
    %v121 = vld [vmem:[#allocation5 + $0x80] sm:$0xff]
    %v122 = vld [vmem:[#allocation5 + $0x88] sm:$0xff]
    %v123 = vld [vmem:[#allocation5 + $0x90] sm:$0xff]
    %v124 = vld [vmem:[#allocation5 + $0x98] sm:$0xff]
    %v125 = vld [vmem:[#allocation5 + $0xa0] sm:$0xff]
    %v126 = vld [vmem:[#allocation5 + $0xa8] sm:$0xff]
    %v127 = vld [vmem:[#allocation5 + $0xb0] sm:$0xff]
    %v128 = vld [vmem:[#allocation5 + $0xb8] sm:$0xff]
    %v129 = vld [vmem:[#allocation5 + $0xc0] sm:$0xff]
    %v130 = vld [vmem:[#allocation5 + $0xc8] sm:$0xff]
    %v131 = vld [vmem:[#allocation5 + $0xd0] sm:$0xff]
    %v132 = vld [vmem:[#allocation5 + $0xd8] sm:$0xff]
    %v133 = vld [vmem:[#allocation5 + $0xe0] sm:$0xff]
    %v134 = vld [vmem:[#allocation5 + $0xe8] sm:$0xff]
    %v135 = vld [vmem:[#allocation5 + $0xf0] sm:$0xff]
    %v136 = vld [vmem:[#allocation5 + $0xf8] sm:$0xff]
    %v137 = vld [vmem:[#allocation5 + $0x100] sm:$0xff]
    %v138 = vld [vmem:[#allocation5 + $0x108] sm:$0xff]
    %v139 = vld [vmem:[#allocation5 + $0x110] sm:$0xff]
    %v140 = vld [vmem:[#allocation5 + $0x118] sm:$0xff]
    %v141 = vld [vmem:[#allocation5 + $0x120] sm:$0xff]
    %v142 = vld [vmem:[#allocation5 + $0x128] sm:$0xff]
    %v143 = vld [vmem:[#allocation5 + $0x130] sm:$0xff]
    %v144 = vld [vmem:[#allocation5 + $0x138] sm:$0xff]
    %v145 = vld [vmem:[#allocation5 + $0x140] sm:$0xff]
    %v146 = vld [vmem:[#allocation5 + $0x148] sm:$0xff]
    %v147 = vld [vmem:[#allocation5 + $0x150] sm:$0xff]
    %v148 = vld [vmem:[#allocation5 + $0x158] sm:$0xff]
    %v149 = vld [vmem:[#allocation5 + $0x160] sm:$0xff]
    %v150 = vld [vmem:[#allocation5 + $0x168] sm:$0xff]
    %v151 = vld [vmem:[#allocation5 + $0x170] sm:$0xff]
    %v152 = vld [vmem:[#allocation5 + $0x178] sm:$0xff]
    %v153 = vld [vmem:[#allocation5 + $0x180] sm:$0xff]
    %v154 = vld [vmem:[#allocation5 + $0x188] sm:$0xff]
    %v155 = vld [vmem:[#allocation5 + $0x190] sm:$0xff]
    %v156 = vld [vmem:[#allocation5 + $0x198] sm:$0xff]
    %v157 = vld [vmem:[#allocation5 + $0x1a0] sm:$0xff]
    %v158 = vld [vmem:[#allocation5 + $0x1a8] sm:$0xff]
    %v159 = vld [vmem:[#allocation5 + $0x1b0] sm:$0xff]
    %v160 = vld [vmem:[#allocation5 + $0x1b8] sm:$0xff]
    %v161 = vld [vmem:[#allocation5 + $0x1c0] sm:$0xff]
    %v162 = vld [vmem:[#allocation5 + $0x1c8] sm:$0xff]
    %v163 = vld [vmem:[#allocation5 + $0x1d0] sm:$0xff]
    %v164 = vld [vmem:[#allocation5 + $0x1d8] sm:$0xff]
    %v165 = vld [vmem:[#allocation5 + $0x1e0] sm:$0xff]
    %v166 = vld [vmem:[#allocation5 + $0x1e8] sm:$0xff]
    %v167 = vld [vmem:[#allocation5 + $0x1f0] sm:$0xff]
    %v168 = vld [vmem:[#allocation5 + $0x1f8] sm:$0xff]
    %v169 = vld [vmem:[#allocation7] sm:$0x3]
    %v171 = vperm.slane %v169, 0
    %v172 = vperm.slane %v169, 1
    %175 = vmatpush.msra.mxu0 %v135
    %176 = vmatpush.msra.mxu0 %v133
    %177 = vmatpush.msra.mxu0 %v131
    %178 = vmatpush.msra.mxu0 %v129
    %179 = vmatpush.msra.mxu0 %v127
    %180 = vmatpush.msra.mxu0 %v125
    %181 = vmatpush.msra.mxu0 %v123
    %182 = vmatpush.msra.mxu0 %v121
    %183 = vmatpush.msra.mxu0 %v119
    %184 = vmatpush.msra.mxu0 %v117
    %185 = vmatpush.msra.mxu0 %v115
    %186 = vmatpush.msra.mxu0 %v113
    %187 = vmatpush.msra.mxu0 %v111
    %188 = vmatpush.msra.mxu0 %v109
    %189 = vmatpush.msra.mxu0 %v107
    %190 = vmatpush.msra.mxu0 %v105
    %191 = vmatmul.f32.gmra.mxu0 %v101
    %v192 = vpop.f32.mrf.mxu0
    %v193 = vadd.f32 %v171, %v192
    %194 = vmatmul.f32.gmra.mxu0 %v103
    %v195 = vpop.f32.mrf.mxu0
    %v196 = vadd.f32 %v171, %v195
    %197 = vdwg.mxu0
    %198 = vmatpush.msra.mxu0 %v167
    %199 = vmatpush.msra.mxu0 %v165
    %200 = vmatpush.msra.mxu0 %v163
    %201 = vmatpush.msra.mxu0 %v161
    %202 = vmatpush.msra.mxu0 %v159
    %203 = vmatpush.msra.mxu0 %v157
    %204 = vmatpush.msra.mxu0 %v155
    %205 = vmatpush.msra.mxu0 %v153
    %206 = vmatpush.msra.mxu0 %v151
    %207 = vmatpush.msra.mxu0 %v149
    %208 = vmatpush.msra.mxu0 %v147
    %209 = vmatpush.msra.mxu0 %v145
    %210 = vmatpush.msra.mxu0 %v143
    %211 = vmatpush.msra.mxu0 %v141
    %212 = vmatpush.msra.mxu0 %v139
    %213 = vmatpush.msra.mxu0 %v137
    %214 = vmatmul.f32.gmra.mxu0 %v102
    %v215 = vpop.f32.mrf.mxu0
    %v216 = vadd.f32 %v193, %v215
    %217 = vmatmul.f32.gmra.mxu0 %v104
    %v218 = vpop.f32.mrf.mxu0
    %v219 = vadd.f32 %v196, %v218
    %220 = vdwg.mxu0
    %221 = vmatpush.msra.mxu0 %v136
    %222 = vmatpush.msra.mxu0 %v134
    %223 = vmatpush.msra.mxu0 %v132
    %224 = vmatpush.msra.mxu0 %v130
    %225 = vmatpush.msra.mxu0 %v128
    %226 = vmatpush.msra.mxu0 %v126
    %227 = vmatpush.msra.mxu0 %v124
    %228 = vmatpush.msra.mxu0 %v122
    %229 = vmatpush.msra.mxu0 %v120
    %230 = vmatpush.msra.mxu0 %v118
    %231 = vmatpush.msra.mxu0 %v116
    %232 = vmatpush.msra.mxu0 %v114
    %233 = vmatpush.msra.mxu0 %v112
    %234 = vmatpush.msra.mxu0 %v110
    %235 = vmatpush.msra.mxu0 %v108
    %236 = vmatpush.msra.mxu0 %v106
    %237 = vmatmul.f32.gmra.mxu0 %v101
    %v238 = vpop.f32.mrf.mxu0
    %v239 = vadd.f32 %v172, %v238
    %240 = vmatmul.f32.gmra.mxu0 %v103
    %v241 = vpop.f32.mrf.mxu0
    %v242 = vadd.f32 %v172, %v241
    %243 = vdwg.mxu0
    %244 = vmatpush.msra.mxu0 %v168
    %245 = vmatpush.msra.mxu0 %v166
    %246 = vmatpush.msra.mxu0 %v164
    %247 = vmatpush.msra.mxu0 %v162
    %248 = vmatpush.msra.mxu0 %v160
    %249 = vmatpush.msra.mxu0 %v158
    %250 = vmatpush.msra.mxu0 %v156
    %251 = vmatpush.msra.mxu0 %v154
    %252 = vmatpush.msra.mxu0 %v152
    %253 = vmatpush.msra.mxu0 %v150
    %254 = vmatpush.msra.mxu0 %v148
    %255 = vmatpush.msra.mxu0 %v146
    %256 = vmatpush.msra.mxu0 %v144
    %257 = vmatpush.msra.mxu0 %v142
    %258 = vmatpush.msra.mxu0 %v140
    %259 = vmatpush.msra.mxu0 %v138
    %260 = vmatmul.f32.gmra.mxu0 %v102
    %v261 = vpop.f32.mrf.mxu0
    %v262 = vadd.f32 %v239, %v261
    %263 = vmatmul.f32.gmra.mxu0 %v104
    %v264 = vpop.f32.mrf.mxu0
    %v265 = vadd.f32 %v242, %v264
    %266 = vdwg.mxu0
    %v267 = vmax.f32 %v216, 0.0
    %v268 = vmax.f32 %v262, 0.0
    %v269 = vmax.f32 %v219, 0.0
    %v270 = vmax.f32 %v265, 0.0
    %v271 = vld [vmem:[#allocation8] sm:$0xff]
    %v272 = vld [vmem:[#allocation8 + $0x8] sm:$0xff]
    %v273 = vld [vmem:[#allocation8 + $0x10] sm:$0xff]
    %v274 = vld [vmem:[#allocation8 + $0x18] sm:$0xff]
    %v275 = vld [vmem:[#allocation8 + $0x20] sm:$0xff]
    %v276 = vld [vmem:[#allocation8 + $0x28] sm:$0xff]
    %v277 = vld [vmem:[#allocation8 + $0x30] sm:$0xff]
    %v278 = vld [vmem:[#allocation8 + $0x38] sm:$0xff]
    %v279 = vld [vmem:[#allocation8 + $0x40] sm:$0xff]
    %v280 = vld [vmem:[#allocation8 + $0x48] sm:$0xff]
    %v281 = vld [vmem:[#allocation8 + $0x50] sm:$0xff]
    %v282 = vld [vmem:[#allocation8 + $0x58] sm:$0xff]
    %v283 = vld [vmem:[#allocation8 + $0x60] sm:$0xff]
    %v284 = vld [vmem:[#allocation8 + $0x68] sm:$0xff]
    %v285 = vld [vmem:[#allocation8 + $0x70] sm:$0xff]
    %v286 = vld [vmem:[#allocation8 + $0x78] sm:$0xff]
    %v287 = vld [vmem:[#allocation8 + $0x80] sm:$0xff]
    %v288 = vld [vmem:[#allocation8 + $0x88] sm:$0xff]
    %v289 = vld [vmem:[#allocation8 + $0x90] sm:$0xff]
    %v290 = vld [vmem:[#allocation8 + $0x98] sm:$0xff]
    %v291 = vld [vmem:[#allocation8 + $0xa0] sm:$0xff]
    %v292 = vld [vmem:[#allocation8 + $0xa8] sm:$0xff]
    %v293 = vld [vmem:[#allocation8 + $0xb0] sm:$0xff]
    %v294 = vld [vmem:[#allocation8 + $0xb8] sm:$0xff]
    %v295 = vld [vmem:[#allocation8 + $0xc0] sm:$0xff]
    %v296 = vld [vmem:[#allocation8 + $0xc8] sm:$0xff]
    %v297 = vld [vmem:[#allocation8 + $0xd0] sm:$0xff]
    %v298 = vld [vmem:[#allocation8 + $0xd8] sm:$0xff]
    %v299 = vld [vmem:[#allocation8 + $0xe0] sm:$0xff]
    %v300 = vld [vmem:[#allocation8 + $0xe8] sm:$0xff]
    %v301 = vld [vmem:[#allocation8 + $0xf0] sm:$0xff]
    %v302 = vld [vmem:[#allocation8 + $0xf8] sm:$0xff]
    %v303 = vld [vmem:[#allocation8 + $0x100] sm:$0xff]
    %v304 = vld [vmem:[#allocation8 + $0x108] sm:$0xff]
    %v305 = vld [vmem:[#allocation8 + $0x110] sm:$0xff]
    %v306 = vld [vmem:[#allocation8 + $0x118] sm:$0xff]
    %v307 = vld [vmem:[#allocation8 + $0x120] sm:$0xff]
    %v308 = vld [vmem:[#allocation8 + $0x128] sm:$0xff]
    %v309 = vld [vmem:[#allocation8 + $0x130] sm:$0xff]
    %v310 = vld [vmem:[#allocation8 + $0x138] sm:$0xff]
    %v311 = vld [vmem:[#allocation8 + $0x140] sm:$0xff]
    %v312 = vld [vmem:[#allocation8 + $0x148] sm:$0xff]
    %v313 = vld [vmem:[#allocation8 + $0x150] sm:$0xff]
    %v314 = vld [vmem:[#allocation8 + $0x158] sm:$0xff]
    %v315 = vld [vmem:[#allocation8 + $0x160] sm:$0xff]
    %v316 = vld [vmem:[#allocation8 + $0x168] sm:$0xff]
    %v317 = vld [vmem:[#allocation8 + $0x170] sm:$0xff]
    %v318 = vld [vmem:[#allocation8 + $0x178] sm:$0xff]
    %v319 = vld [vmem:[#allocation8 + $0x180] sm:$0xff]
    %v320 = vld [vmem:[#allocation8 + $0x188] sm:$0xff]
    %v321 = vld [vmem:[#allocation8 + $0x190] sm:$0xff]
    %v322 = vld [vmem:[#allocation8 + $0x198] sm:$0xff]
    %v323 = vld [vmem:[#allocation8 + $0x1a0] sm:$0xff]
    %v324 = vld [vmem:[#allocation8 + $0x1a8] sm:$0xff]
    %v325 = vld [vmem:[#allocation8 + $0x1b0] sm:$0xff]
    %v326 = vld [vmem:[#allocation8 + $0x1b8] sm:$0xff]
    %v327 = vld [vmem:[#allocation8 + $0x1c0] sm:$0xff]
    %v328 = vld [vmem:[#allocation8 + $0x1c8] sm:$0xff]
    %v329 = vld [vmem:[#allocation8 + $0x1d0] sm:$0xff]
    %v330 = vld [vmem:[#allocation8 + $0x1d8] sm:$0xff]
    %v331 = vld [vmem:[#allocation8 + $0x1e0] sm:$0xff]
    %v332 = vld [vmem:[#allocation8 + $0x1e8] sm:$0xff]
    %v333 = vld [vmem:[#allocation8 + $0x1f0] sm:$0xff]
    %v334 = vld [vmem:[#allocation8 + $0x1f8] sm:$0xff]
    %v335 = vld [vmem:[%s4] sm:$0x3]
    %v337 = vperm.slane %v335, 0
    %v338 = vperm.slane %v335, 1
    %341 = vmatpush.msra.mxu0 %v301
    %342 = vmatpush.msra.mxu0 %v299
    %343 = vmatpush.msra.mxu0 %v297
    %344 = vmatpush.msra.mxu0 %v295
    %345 = vmatpush.msra.mxu0 %v293
    %346 = vmatpush.msra.mxu0 %v291
    %347 = vmatpush.msra.mxu0 %v289
    %348 = vmatpush.msra.mxu0 %v287
    %349 = vmatpush.msra.mxu0 %v285
    %350 = vmatpush.msra.mxu0 %v283
    %351 = vmatpush.msra.mxu0 %v281
    %352 = vmatpush.msra.mxu0 %v279
    %353 = vmatpush.msra.mxu0 %v277
    %354 = vmatpush.msra.mxu0 %v275
    %355 = vmatpush.msra.mxu0 %v273
    %356 = vmatpush.msra.mxu0 %v271
    %357 = vmatmul.f32.gmra.mxu0 %v267
    %v358 = vpop.f32.mrf.mxu0
    %v359 = vadd.f32 %v337, %v358
    %360 = vmatmul.f32.gmra.mxu0 %v269
    %v361 = vpop.f32.mrf.mxu0
    %v362 = vadd.f32 %v337, %v361
    %363 = vdwg.mxu0
    %364 = vmatpush.msra.mxu0 %v333
    %365 = vmatpush.msra.mxu0 %v331
    %366 = vmatpush.msra.mxu0 %v329
    %367 = vmatpush.msra.mxu0 %v327
    %368 = vmatpush.msra.mxu0 %v325
    %369 = vmatpush.msra.mxu0 %v323
    %370 = vmatpush.msra.mxu0 %v321
    %371 = vmatpush.msra.mxu0 %v319
    %372 = vmatpush.msra.mxu0 %v317
    %373 = vmatpush.msra.mxu0 %v315
    %374 = vmatpush.msra.mxu0 %v313
    %375 = vmatpush.msra.mxu0 %v311
    %376 = vmatpush.msra.mxu0 %v309
    %377 = vmatpush.msra.mxu0 %v307
    %378 = vmatpush.msra.mxu0 %v305
    %379 = vmatpush.msra.mxu0 %v303
    %380 = vmatmul.f32.gmra.mxu0 %v268
    %v381 = vpop.f32.mrf.mxu0
    %v382 = vadd.f32 %v359, %v381
    %383 = vmatmul.f32.gmra.mxu0 %v270
    %v384 = vpop.f32.mrf.mxu0
    %v385 = vadd.f32 %v362, %v384
    %386 = vdwg.mxu0
    %387 = vmatpush.msra.mxu0 %v302
    %388 = vmatpush.msra.mxu0 %v300
    %389 = vmatpush.msra.mxu0 %v298
    %390 = vmatpush.msra.mxu0 %v296
    %391 = vmatpush.msra.mxu0 %v294
    %392 = vmatpush.msra.mxu0 %v292
    %393 = vmatpush.msra.mxu0 %v290
    %394 = vmatpush.msra.mxu0 %v288
    %395 = vmatpush.msra.mxu0 %v286
    %396 = vmatpush.msra.mxu0 %v284
    %397 = vmatpush.msra.mxu0 %v282
    %398 = vmatpush.msra.mxu0 %v280
    %399 = vmatpush.msra.mxu0 %v278
    %400 = vmatpush.msra.mxu0 %v276
    %401 = vmatpush.msra.mxu0 %v274
    %402 = vmatpush.msra.mxu0 %v272
    %403 = vmatmul.f32.gmra.mxu0 %v267
    %v404 = vpop.f32.mrf.mxu0
    %v405 = vadd.f32 %v338, %v404
    %406 = vmatmul.f32.gmra.mxu0 %v269
    %v407 = vpop.f32.mrf.mxu0
    %v408 = vadd.f32 %v338, %v407
    %409 = vdwg.mxu0
    %410 = vmatpush.msra.mxu0 %v334
    %411 = vmatpush.msra.mxu0 %v332
    %412 = vmatpush.msra.mxu0 %v330
    %413 = vmatpush.msra.mxu0 %v328
    %414 = vmatpush.msra.mxu0 %v326
    %415 = vmatpush.msra.mxu0 %v324
    %416 = vmatpush.msra.mxu0 %v322
    %417 = vmatpush.msra.mxu0 %v320
    %418 = vmatpush.msra.mxu0 %v318
    %419 = vmatpush.msra.mxu0 %v316
    %420 = vmatpush.msra.mxu0 %v314
    %421 = vmatpush.msra.mxu0 %v312
    %422 = vmatpush.msra.mxu0 %v310
    %423 = vmatpush.msra.mxu0 %v308
    %424 = vmatpush.msra.mxu0 %v306
    %425 = vmatpush.msra.mxu0 %v304
    %426 = vmatmul.f32.gmra.mxu0 %v268
    %v427 = vpop.f32.mrf.mxu0
    %v428 = vadd.f32 %v405, %v427
    %429 = vmatmul.f32.gmra.mxu0 %v270
    %v430 = vpop.f32.mrf.mxu0
    %v431 = vadd.f32 %v408, %v430
    %432 = vdwg.mxu0
    %v433 = vadd.f32 %v382, %v428
    %434 = vadd.xlane.f32.xlu0 %v433
    %v435 = vpop.xlane.xlu0 %434
    %v436 = vadd.f32 %v385, %v431
    %437 = vadd.xlane.f32.xlu0 %v436
    %v438 = vpop.xlane.xlu0 %437
    %v439 = vrcp.pop 256.0
    %v440 = vmul.f32 256.0, %v439
    %v441 = vsub.f32 1.0, %v440
    %v442 = vmul.f32 %v439, %v441
    %v443 = vadd.f32 %v439, %v442
    %vm444 = vweird.f32 %v439
    %v445 = vsel %vm444, %v439, %v443
    %v446 = vmul.f32 %v435, %v445
    %v447 = vmul.f32 %v438, %v445
    %v448 = vsub.f32 %v382, %v446
    %v449 = vsub.f32 %v428, %v446
    %v450 = vsub.f32 %v385, %v447
    %v451 = vsub.f32 %v431, %v447
    %v452 = vmul.f32 %v448, %v448
    %v453 = vmul.f32 %v449, %v449
    %v454 = vmul.f32 %v450, %v450
    %v455 = vmul.f32 %v451, %v451
    %v456 = vadd.f32 %v452, %v453
    %457 = vadd.xlane.f32.xlu0 %v456
    %v458 = vpop.xlane.xlu0 %457
    %v459 = vadd.f32 %v454, %v455
    %460 = vadd.xlane.f32.xlu0 %v459
    %v461 = vpop.xlane.xlu0 %460
    %v462 = vmul.f32 %v458, %v445
    %v463 = vmul.f32 %v461, %v445
    %v464 = vadd.f32 %v462, 1e-05
    %v465 = vadd.f32 %v463, 1e-05
    %v466 = vrsqrt.pop %v464
    %v467 = vmul.f32 %v466, %v464
    %v468 = vmul.f32 %v467, %v466
    %v469 = vmul.f32 0.5, %v468
    %v470 = vsub.f32 1.5, %v469
    %v471 = vmul.f32 %v466, %v470
    %vm472 = vweird.f32 %v464
    %vm473 = vweird.f32 %v466
    %vm474 = vmor %vm472, %vm473
    %v475 = vsel %vm474, %v466, %v471
    %v476 = vrsqrt.pop %v465
    %v477 = vmul.f32 %v476, %v465
    %v478 = vmul.f32 %v477, %v476
    %v479 = vmul.f32 0.5, %v478
    %v480 = vsub.f32 1.5, %v479
    %v481 = vmul.f32 %v476, %v480
    %vm482 = vweird.f32 %v465
    %vm483 = vweird.f32 %v476
    %vm484 = vmor %vm482, %vm483
    %v485 = vsel %vm484, %v476, %v481
    %v486 = vmul.f32 %v448, %v475
    %v487 = vmul.f32 %v449, %v475
    %v488 = vmul.f32 %v450, %v485
    %v489 = vmul.f32 %v451, %v485
    %v490 = vld [vmem:[%s5] sm:$0x3]
    %v492 = vperm.slane %v490, 0
    %v493 = vperm.slane %v490, 1
    %v496 = vmul.f32 %v486, %v492
    %v497 = vmul.f32 %v487, %v493
    %v498 = vmul.f32 %v488, %v492
    %v499 = vmul.f32 %v489, %v493
    %v500 = vld [vmem:[#allocation10] sm:$0x3]
    %v502 = vperm.slane %v500, 0
    %v503 = vperm.slane %v500, 1
    %v506 = vadd.f32 %v496, %v502
    %v507 = vadd.f32 %v497, %v503
    %v508 = vadd.f32 %v498, %v502
    %v509 = vadd.f32 %v499, %v503
    %510 = vst [vmem:[#allocation11] sm:$0xff] %v506
    %511 = vst [vmem:[#allocation11 + $0x8] sm:$0xff] %v507
    %512 = vst [vmem:[#allocation11 + $0x10] sm:$0xff] %v508
    %513 = vst [vmem:[#allocation11 + $0x18] sm:$0xff] %v509
    // Predicated region
    $region50: #{tpu_custom_call.1} parent=1 // pred_check
      _
    $region51: #{tpu_custom_call.1} parent=1 // pred_check_branch
      %515 = sbr.rel (0) target = $region53
    $region52: #{tpu_custom_call.1} parent=1 // pred_region
      %517 = vsyncadd [#allocation4], 0
      %s518 = sshll.u32 [#allocation11], 4
      %s519 = int_to_ptr.vmem [resolvable:$true] %s518
      %s520 = sshll.u32 %s7, 4
      %s521 = int_to_ptr.hbm [resolvable:$true] %s520
      %526 = dma.vmem_to_hbm [thread:$0]  %s519, 512, %s521, [#allocation4], 256, 256, 16
    $region53: #{tpu_custom_call.1} parent=1 // pred_fallthru
      _
    // Predicated region
    $region54: #{tpu_custom_call.1} parent=1 // pred_check
      _
    $region55: #{tpu_custom_call.1} parent=1 // pred_check_branch
      %528 = sbr.rel (0) target = $region57
    $region56: #{tpu_custom_call.1} parent=1 // pred_region
      %530 = dma.done [#allocation4], 512
    $region57: #{tpu_custom_call.1} parent=1 // pred_fallthru
      _
    %531 = vsyncpa [#allocation3], 1
    %532 = vsyncpa [#allocation6], 1
    %533 = vsyncpa [#allocation9], 1
    %534 = vsyncpa [#allocation4], 1

// kernel: tpu_custom_call.1
$region0: #{tpu_custom_call.1}
  #allocation0 [shape = 'u32[]', space=smem, size = 0x4, offset = 0x4, fixed_abs, tag = 'smem constant byte address 0x4 - core index']
  #allocation1 [shape = 'u32[72,128]{1,0:T(1,128)}', space=vmem, size = 0x9000, scoped, tag = 'internal scratch']
  %s0 = inlined_call_operand.hbm [shape: f32[16,256], index: 0, kind: input, shape index: {}]
  %s1 = inlined_call_operand.hbm [shape: f32[256,256], index: 1, kind: input, shape index: {}]
  %s2 = inlined_call_operand.hbm [shape: f32[1,256], index: 2, kind: input, shape index: {}]
  %s3 = inlined_call_operand.hbm [shape: f32[256,256], index: 3, kind: input, shape index: {}]
  %s4 = inlined_call_operand.vmem [shape: f32[1,256], index: 4, kind: input, shape index: {}]
  %s5 = inlined_call_operand.vmem [shape: f32[1,256], index: 5, kind: input, shape index: {}]
  %s6 = inlined_call_operand.hbm [shape: f32[1,256], index: 6, kind: input, shape index: {}]
  %s7 = inlined_call_operand.hbm [shape: f32[16,256], index: 7, kind: output, shape index: {}]
  %s8 = sld [smem:[#allocation0]]
  $region58: #{tpu_custom_call.1} parent=0
    _
  %s10 = ssub.s32 1, %s8
  %s11 = scalar_select 0, %s10, %s8
  $region1: #{tpu_custom_call.1} parent=0
    #allocation2 [shape = 'u8[16384]{0}', space=vmem, size = 0x4000, scoped, tag = 'input window, operand 0, single buffered']
    #allocation3 [shape = 's32[1]{0}', space=sflag, size = 0x4, scoped, tag = 'scoped memory for tpu_custom_call.1']
    #allocation4 [shape = 's32[1]{0}', space=sflag, size = 0x4, scoped, tag = 'scoped memory for tpu_custom_call.1']
    #allocation5 [shape = 'u8[262144]{0}', space=vmem, size = 0x40000, scoped, tag = 'input window, operand 1, single buffered']
    #allocation6 [shape = 's32[1]{0}', space=sflag, size = 0x4, scoped, tag = 'scoped memory for tpu_custom_call.1']
    #allocation7 [shape = 'u8[1024]{0}', space=vmem, size = 0x400, scoped, tag = 'input window, operand 2, single buffered']
    #allocation8 [shape = 'u8[262144]{0}', space=vmem, size = 0x40000, scoped, tag = 'input window, operand 3, single buffered']
    #allocation9 [shape = 's32[1]{0}', space=sflag, size = 0x4, scoped, tag = 'scoped memory for tpu_custom_call.1']
    #allocation10 [shape = 'u8[1024]{0}', space=vmem, size = 0x400, scoped, tag = 'input window, operand 6, single buffered']
    #allocation11 [shape = 'u8[16384]{0}', space=vmem, size = 0x4000, scoped, tag = 'output window, operand 0, single buffered']
    %12 = vsyncpa [#allocation3], 0
    %13 = vsyncpa [#allocation6], 0
    %14 = vsyncpa [#allocation9], 0
    %15 = vsyncpa [#allocation4], 0
    // Predicated region
    $region2: #{tpu_custom_call.1} parent=1 // pred_check
      _
    $region3: #{tpu_custom_call.1} parent=1 // pred_check_branch
      %17 = sbr.rel (0) target = $region5
    $region4: #{tpu_custom_call.1} parent=1 // pred_region
      %19 = vsyncadd [#allocation3], 0
      %s20 = sshll.u32 %s0, 4
      %s21 = int_to_ptr.hbm [resolvable:$true] %s20
      %s22 = sshll.u32 [#allocation2], 4
      %s23 = int_to_ptr.vmem [resolvable:$true] %s22
      %28 = dma.hbm_to_vmem [thread:$0]  %s21, 512, %s23, [#allocation3], 256, 256, 16
    $region5: #{tpu_custom_call.1} parent=1 // pred_fallthru
      _
    // Predicated region
    $region6: #{tpu_custom_call.1} parent=1 // pred_check
      _
    $region7: #{tpu_custom_call.1} parent=1 // pred_check_branch
      %30 = sbr.rel (0) target = $region9
    $region8: #{tpu_custom_call.1} parent=1 // pred_region
      %32 = vsyncadd [#allocation6], 0
      %s33 = sshll.u32 %s1, 4
      %s34 = int_to_ptr.hbm [resolvable:$true] %s33
      %s35 = sshll.u32 [#allocation5], 4
      %s36 = int_to_ptr.vmem [resolvable:$true] %s35
      %41 = dma.hbm_to_vmem [thread:$0]  %s34, 8192, %s36, [#allocation6], 256, 256, 16
    $region9: #{tpu_custom_call.1} parent=1 // pred_fallthru
      _
    // Predicated region
    $region10: #{tpu_custom_call.1} parent=1 // pred_check
      _
    $region11: #{tpu_custom_call.1} parent=1 // pred_check_branch
      %43 = sbr.rel (0) target = $region13
    $region12: #{tpu_custom_call.1} parent=1 // pred_region
      %45 = vsyncadd [#allocation6], 0
      %s47 = sshll.u32 %s2, 4
      %s48 = int_to_ptr.hbm [resolvable:$true] %s47
      %s49 = sshll.u32 [#allocation7], 4
      %s50 = int_to_ptr.vmem [resolvable:$true] %s49
      %52 = dma.hbm_to_vmem [thread:$0]  %s48, 32, %s50, [#allocation6]
    $region13: #{tpu_custom_call.1} parent=1 // pred_fallthru
      _
    // Predicated region
    $region14: #{tpu_custom_call.1} parent=1 // pred_check
      _
    $region15: #{tpu_custom_call.1} parent=1 // pred_check_branch
      %54 = sbr.rel (0) target = $region17
    $region16: #{tpu_custom_call.1} parent=1 // pred_region
      %56 = vsyncadd [#allocation9], 0
      %s57 = sshll.u32 %s3, 4
      %s58 = int_to_ptr.hbm [resolvable:$true] %s57
      %s59 = sshll.u32 [#allocation8], 4
      %s60 = int_to_ptr.vmem [resolvable:$true] %s59
      %65 = dma.hbm_to_vmem [thread:$0]  %s58, 8192, %s60, [#allocation9], 256, 256, 16
    $region17: #{tpu_custom_call.1} parent=1 // pred_fallthru
      _
    // Predicated region
    $region18: #{tpu_custom_call.1} parent=1 // pred_check
      _
    $region19: #{tpu_custom_call.1} parent=1 // pred_check_branch
      %67 = sbr.rel (0) target = $region21
    $region20: #{tpu_custom_call.1} parent=1 // pred_region
      _
    $region21: #{tpu_custom_call.1} parent=1 // pred_fallthru
      _
    // Predicated region
    $region22: #{tpu_custom_call.1} parent=1 // pred_check
      _
    $region23: #{tpu_custom_call.1} parent=1 // pred_check_branch
      %69 = sbr.rel (0) target = $region25
    $region24: #{tpu_custom_call.1} parent=1 // pred_region
      _
    $region25: #{tpu_custom_call.1} parent=1 // pred_fallthru
      _
    // Predicated region
    $region26: #{tpu_custom_call.1} parent=1 // pred_check
      _
    $region27: #{tpu_custom_call.1} parent=1 // pred_check_branch
      %71 = sbr.rel (0) target = $region29
    $region28: #{tpu_custom_call.1} parent=1 // pred_region
      %73 = vsyncadd [#allocation9], 0
      %s75 = sshll.u32 %s6, 4
      %s76 = int_to_ptr.hbm [resolvable:$true] %s75
      %s77 = sshll.u32 [#allocation10], 4
      %s78 = int_to_ptr.vmem [resolvable:$true] %s77
      %80 = dma.hbm_to_vmem [thread:$0]  %s76, 32, %s78, [#allocation9]
    $region29: #{tpu_custom_call.1} parent=1 // pred_fallthru
      _
    // Predicated region
    $region30: #{tpu_custom_call.1} parent=1 // pred_check
      _
    $region31: #{tpu_custom_call.1} parent=1 // pred_check_branch
      %82 = sbr.rel (0) target = $region33
    $region32: #{tpu_custom_call.1} parent=1 // pred_region
      %84 = dma.done [#allocation3], 512
    $region33: #{tpu_custom_call.1} parent=1 // pred_fallthru
      _
    // Predicated region
    $region34: #{tpu_custom_call.1} parent=1 // pred_check
      _
    $region35: #{tpu_custom_call.1} parent=1 // pred_check_branch
      %86 = sbr.rel (0) target = $region37
    $region36: #{tpu_custom_call.1} parent=1 // pred_region
      %88 = dma.done [#allocation6], 8192
    $region37: #{tpu_custom_call.1} parent=1 // pred_fallthru
      _
    // Predicated region
    $region38: #{tpu_custom_call.1} parent=1 // pred_check
      _
    $region39: #{tpu_custom_call.1} parent=1 // pred_check_branch
      %90 = sbr.rel (0) target = $region41
    $region40: #{tpu_custom_call.1} parent=1 // pred_region
      %92 = dma.done [#allocation6], 32
    $region41: #{tpu_custom_call.1} parent=1 // pred_fallthru
      _
    // Predicated region
    $region42: #{tpu_custom_call.1} parent=1 // pred_check
      _
    $region43: #{tpu_custom_call.1} parent=1 // pred_check_branch
      %94 = sbr.rel (0) target = $region45
    $region44: #{tpu_custom_call.1} parent=1 // pred_region
      %96 = dma.done [#allocation9], 8192
    $region45: #{tpu_custom_call.1} parent=1 // pred_fallthru
      _
    // Predicated region
    $region46: #{tpu_custom_call.1} parent=1 // pred_check
      _
    $region47: #{tpu_custom_call.1} parent=1 // pred_check_branch
      %98 = sbr.rel (0) target = $region49
    $region48: #{tpu_custom_call.1} parent=1 // pred_region
      %100 = dma.done [#allocation9], 32
    $region49: #{tpu_custom_call.1} parent=1 // pred_fallthru
      _
    %v101 = vld [vmem:[#allocation2] sm:$0xff]
    %v102 = vld [vmem:[#allocation2 + $0x8] sm:$0xff]
    %v103 = vld [vmem:[#allocation2 + $0x10] sm:$0xff]
    %v104 = vld [vmem:[#allocation2 + $0x18] sm:$0xff]
    %v105 = vld [vmem:[#allocation5] sm:$0xff]
    %v106 = vld [vmem:[#allocation5 + $0x8] sm:$0xff]
    %v107 = vld [vmem:[#allocation5 + $0x10] sm:$0xff]
    %v108 = vld [vmem:[#allocation5 + $0x18] sm:$0xff]
    %v109 = vld [vmem:[#allocation5 + $0x20] sm:$0xff]
    %v110 = vld [vmem:[#allocation5 + $0x28] sm:$0xff]
    %v111 = vld [vmem:[#allocation5 + $0x30] sm:$0xff]
    %v112 = vld [vmem:[#allocation5 + $0x38] sm:$0xff]
    %v113 = vld [vmem:[#allocation5 + $0x40] sm:$0xff]
    %v114 = vld [vmem:[#allocation5 + $0x48] sm:$0xff]
    %v115 = vld [vmem:[#allocation5 + $0x50] sm:$0xff]
    %v116 = vld [vmem:[#allocation5 + $0x58] sm:$0xff]
    %v117 = vld [vmem:[#allocation5 + $0x60] sm:$0xff]
    %v118 = vld [vmem:[#allocation5 + $0x68] sm:$0xff]
    %v119 = vld [vmem:[#allocation5 + $0x70] sm:$0xff]
    %v120 = vld [vmem:[#allocation5 + $0x78] sm:$0xff]
    %v121 = vld [vmem:[#allocation5 + $0x80] sm:$0xff]
    %v122 = vld [vmem:[#allocation5 + $0x88] sm:$0xff]
    %v123 = vld [vmem:[#allocation5 + $0x90] sm:$0xff]
    %v124 = vld [vmem:[#allocation5 + $0x98] sm:$0xff]
    %v125 = vld [vmem:[#allocation5 + $0xa0] sm:$0xff]
    %v126 = vld [vmem:[#allocation5 + $0xa8] sm:$0xff]
    %v127 = vld [vmem:[#allocation5 + $0xb0] sm:$0xff]
    %v128 = vld [vmem:[#allocation5 + $0xb8] sm:$0xff]
    %v129 = vld [vmem:[#allocation5 + $0xc0] sm:$0xff]
    %v130 = vld [vmem:[#allocation5 + $0xc8] sm:$0xff]
    %v131 = vld [vmem:[#allocation5 + $0xd0] sm:$0xff]
    %v132 = vld [vmem:[#allocation5 + $0xd8] sm:$0xff]
    %v133 = vld [vmem:[#allocation5 + $0xe0] sm:$0xff]
    %v134 = vld [vmem:[#allocation5 + $0xe8] sm:$0xff]
    %v135 = vld [vmem:[#allocation5 + $0xf0] sm:$0xff]
    %v136 = vld [vmem:[#allocation5 + $0xf8] sm:$0xff]
    %v137 = vld [vmem:[#allocation5 + $0x100] sm:$0xff]
    %v138 = vld [vmem:[#allocation5 + $0x108] sm:$0xff]
    %v139 = vld [vmem:[#allocation5 + $0x110] sm:$0xff]
    %v140 = vld [vmem:[#allocation5 + $0x118] sm:$0xff]
    %v141 = vld [vmem:[#allocation5 + $0x120] sm:$0xff]
    %v142 = vld [vmem:[#allocation5 + $0x128] sm:$0xff]
    %v143 = vld [vmem:[#allocation5 + $0x130] sm:$0xff]
    %v144 = vld [vmem:[#allocation5 + $0x138] sm:$0xff]
    %v145 = vld [vmem:[#allocation5 + $0x140] sm:$0xff]
    %v146 = vld [vmem:[#allocation5 + $0x148] sm:$0xff]
    %v147 = vld [vmem:[#allocation5 + $0x150] sm:$0xff]
    %v148 = vld [vmem:[#allocation5 + $0x158] sm:$0xff]
    %v149 = vld [vmem:[#allocation5 + $0x160] sm:$0xff]
    %v150 = vld [vmem:[#allocation5 + $0x168] sm:$0xff]
    %v151 = vld [vmem:[#allocation5 + $0x170] sm:$0xff]
    %v152 = vld [vmem:[#allocation5 + $0x178] sm:$0xff]
    %v153 = vld [vmem:[#allocation5 + $0x180] sm:$0xff]
    %v154 = vld [vmem:[#allocation5 + $0x188] sm:$0xff]
    %v155 = vld [vmem:[#allocation5 + $0x190] sm:$0xff]
    %v156 = vld [vmem:[#allocation5 + $0x198] sm:$0xff]
    %v157 = vld [vmem:[#allocation5 + $0x1a0] sm:$0xff]
    %v158 = vld [vmem:[#allocation5 + $0x1a8] sm:$0xff]
    %v159 = vld [vmem:[#allocation5 + $0x1b0] sm:$0xff]
    %v160 = vld [vmem:[#allocation5 + $0x1b8] sm:$0xff]
    %v161 = vld [vmem:[#allocation5 + $0x1c0] sm:$0xff]
    %v162 = vld [vmem:[#allocation5 + $0x1c8] sm:$0xff]
    %v163 = vld [vmem:[#allocation5 + $0x1d0] sm:$0xff]
    %v164 = vld [vmem:[#allocation5 + $0x1d8] sm:$0xff]
    %v165 = vld [vmem:[#allocation5 + $0x1e0] sm:$0xff]
    %v166 = vld [vmem:[#allocation5 + $0x1e8] sm:$0xff]
    %v167 = vld [vmem:[#allocation5 + $0x1f0] sm:$0xff]
    %v168 = vld [vmem:[#allocation5 + $0x1f8] sm:$0xff]
    %v169 = vld [vmem:[#allocation7] sm:$0x3]
    %v171 = vperm.slane %v169, 0
    %v172 = vperm.slane %v169, 1
    %175 = vmatpush.msra.mxu0 %v135
    %176 = vmatpush.msra.mxu0 %v133
    %177 = vmatpush.msra.mxu0 %v131
    %178 = vmatpush.msra.mxu0 %v129
    %179 = vmatpush.msra.mxu0 %v127
    %180 = vmatpush.msra.mxu0 %v125
    %181 = vmatpush.msra.mxu0 %v123
    %182 = vmatpush.msra.mxu0 %v121
    %183 = vmatpush.msra.mxu0 %v119
    %184 = vmatpush.msra.mxu0 %v117
    %185 = vmatpush.msra.mxu0 %v115
    %186 = vmatpush.msra.mxu0 %v113
    %187 = vmatpush.msra.mxu0 %v111
    %188 = vmatpush.msra.mxu0 %v109
    %189 = vmatpush.msra.mxu0 %v107
    %190 = vmatpush.msra.mxu0 %v105
    %191 = vmatmul.f32.gmra.mxu0 %v101
    %v192 = vpop.f32.mrf.mxu0
    %v193 = vadd.f32 %v171, %v192
    %194 = vmatmul.f32.gmra.mxu0 %v103
    %v195 = vpop.f32.mrf.mxu0
    %v196 = vadd.f32 %v171, %v195
    %197 = vdwg.mxu0
    %198 = vmatpush.msra.mxu0 %v167
    %199 = vmatpush.msra.mxu0 %v165
    %200 = vmatpush.msra.mxu0 %v163
    %201 = vmatpush.msra.mxu0 %v161
    %202 = vmatpush.msra.mxu0 %v159
    %203 = vmatpush.msra.mxu0 %v157
    %204 = vmatpush.msra.mxu0 %v155
    %205 = vmatpush.msra.mxu0 %v153
    %206 = vmatpush.msra.mxu0 %v151
    %207 = vmatpush.msra.mxu0 %v149
    %208 = vmatpush.msra.mxu0 %v147
    %209 = vmatpush.msra.mxu0 %v145
    %210 = vmatpush.msra.mxu0 %v143
    %211 = vmatpush.msra.mxu0 %v141
    %212 = vmatpush.msra.mxu0 %v139
    %213 = vmatpush.msra.mxu0 %v137
    %214 = vmatmul.f32.gmra.mxu0 %v102
    %v215 = vpop.f32.mrf.mxu0
    %v216 = vadd.f32 %v193, %v215
    %217 = vmatmul.f32.gmra.mxu0 %v104
    %v218 = vpop.f32.mrf.mxu0
    %v219 = vadd.f32 %v196, %v218
    %220 = vdwg.mxu0
    %221 = vmatpush.msra.mxu0 %v136
    %222 = vmatpush.msra.mxu0 %v134
    %223 = vmatpush.msra.mxu0 %v132
    %224 = vmatpush.msra.mxu0 %v130
    %225 = vmatpush.msra.mxu0 %v128
    %226 = vmatpush.msra.mxu0 %v126
    %227 = vmatpush.msra.mxu0 %v124
    %228 = vmatpush.msra.mxu0 %v122
    %229 = vmatpush.msra.mxu0 %v120
    %230 = vmatpush.msra.mxu0 %v118
    %231 = vmatpush.msra.mxu0 %v116
    %232 = vmatpush.msra.mxu0 %v114
    %233 = vmatpush.msra.mxu0 %v112
    %234 = vmatpush.msra.mxu0 %v110
    %235 = vmatpush.msra.mxu0 %v108
    %236 = vmatpush.msra.mxu0 %v106
    %237 = vmatmul.f32.gmra.mxu0 %v101
    %v238 = vpop.f32.mrf.mxu0
    %v239 = vadd.f32 %v172, %v238
    %240 = vmatmul.f32.gmra.mxu0 %v103
    %v241 = vpop.f32.mrf.mxu0
    %v242 = vadd.f32 %v172, %v241
    %243 = vdwg.mxu0
    %244 = vmatpush.msra.mxu0 %v168
    %245 = vmatpush.msra.mxu0 %v166
    %246 = vmatpush.msra.mxu0 %v164
    %247 = vmatpush.msra.mxu0 %v162
    %248 = vmatpush.msra.mxu0 %v160
    %249 = vmatpush.msra.mxu0 %v158
    %250 = vmatpush.msra.mxu0 %v156
    %251 = vmatpush.msra.mxu0 %v154
    %252 = vmatpush.msra.mxu0 %v152
    %253 = vmatpush.msra.mxu0 %v150
    %254 = vmatpush.msra.mxu0 %v148
    %255 = vmatpush.msra.mxu0 %v146
    %256 = vmatpush.msra.mxu0 %v144
    %257 = vmatpush.msra.mxu0 %v142
    %258 = vmatpush.msra.mxu0 %v140
    %259 = vmatpush.msra.mxu0 %v138
    %260 = vmatmul.f32.gmra.mxu0 %v102
    %v261 = vpop.f32.mrf.mxu0
    %v262 = vadd.f32 %v239, %v261
    %263 = vmatmul.f32.gmra.mxu0 %v104
    %v264 = vpop.f32.mrf.mxu0
    %v265 = vadd.f32 %v242, %v264
    %266 = vdwg.mxu0
    %v267 = vmax.f32 %v216, 0.0
    %v268 = vmax.f32 %v262, 0.0
    %v269 = vmax.f32 %v219, 0.0
    %v270 = vmax.f32 %v265, 0.0
    %v271 = vld [vmem:[#allocation8] sm:$0xff]
    %v272 = vld [vmem:[#allocation8 + $0x8] sm:$0xff]
    %v273 = vld [vmem:[#allocation8 + $0x10] sm:$0xff]
    %v274 = vld [vmem:[#allocation8 + $0x18] sm:$0xff]
    %v275 = vld [vmem:[#allocation8 + $0x20] sm:$0xff]
    %v276 = vld [vmem:[#allocation8 + $0x28] sm:$0xff]
    %v277 = vld [vmem:[#allocation8 + $0x30] sm:$0xff]
    %v278 = vld [vmem:[#allocation8 + $0x38] sm:$0xff]
    %v279 = vld [vmem:[#allocation8 + $0x40] sm:$0xff]
    %v280 = vld [vmem:[#allocation8 + $0x48] sm:$0xff]
    %v281 = vld [vmem:[#allocation8 + $0x50] sm:$0xff]
    %v282 = vld [vmem:[#allocation8 + $0x58] sm:$0xff]
    %v283 = vld [vmem:[#allocation8 + $0x60] sm:$0xff]
    %v284 = vld [vmem:[#allocation8 + $0x68] sm:$0xff]
    %v285 = vld [vmem:[#allocation8 + $0x70] sm:$0xff]
    %v286 = vld [vmem:[#allocation8 + $0x78] sm:$0xff]
    %v287 = vld [vmem:[#allocation8 + $0x80] sm:$0xff]
    %v288 = vld [vmem:[#allocation8 + $0x88] sm:$0xff]
    %v289 = vld [vmem:[#allocation8 + $0x90] sm:$0xff]
    %v290 = vld [vmem:[#allocation8 + $0x98] sm:$0xff]
    %v291 = vld [vmem:[#allocation8 + $0xa0] sm:$0xff]
    %v292 = vld [vmem:[#allocation8 + $0xa8] sm:$0xff]
    %v293 = vld [vmem:[#allocation8 + $0xb0] sm:$0xff]
    %v294 = vld [vmem:[#allocation8 + $0xb8] sm:$0xff]
    %v295 = vld [vmem:[#allocation8 + $0xc0] sm:$0xff]
    %v296 = vld [vmem:[#allocation8 + $0xc8] sm:$0xff]
    %v297 = vld [vmem:[#allocation8 + $0xd0] sm:$0xff]
    %v298 = vld [vmem:[#allocation8 + $0xd8] sm:$0xff]
    %v299 = vld [vmem:[#allocation8 + $0xe0] sm:$0xff]
    %v300 = vld [vmem:[#allocation8 + $0xe8] sm:$0xff]
    %v301 = vld [vmem:[#allocation8 + $0xf0] sm:$0xff]
    %v302 = vld [vmem:[#allocation8 + $0xf8] sm:$0xff]
    %v303 = vld [vmem:[#allocation8 + $0x100] sm:$0xff]
    %v304 = vld [vmem:[#allocation8 + $0x108] sm:$0xff]
    %v305 = vld [vmem:[#allocation8 + $0x110] sm:$0xff]
    %v306 = vld [vmem:[#allocation8 + $0x118] sm:$0xff]
    %v307 = vld [vmem:[#allocation8 + $0x120] sm:$0xff]
    %v308 = vld [vmem:[#allocation8 + $0x128] sm:$0xff]
    %v309 = vld [vmem:[#allocation8 + $0x130] sm:$0xff]
    %v310 = vld [vmem:[#allocation8 + $0x138] sm:$0xff]
    %v311 = vld [vmem:[#allocation8 + $0x140] sm:$0xff]
    %v312 = vld [vmem:[#allocation8 + $0x148] sm:$0xff]
    %v313 = vld [vmem:[#allocation8 + $0x150] sm:$0xff]
    %v314 = vld [vmem:[#allocation8 + $0x158] sm:$0xff]
    %v315 = vld [vmem:[#allocation8 + $0x160] sm:$0xff]
    %v316 = vld [vmem:[#allocation8 + $0x168] sm:$0xff]
    %v317 = vld [vmem:[#allocation8 + $0x170] sm:$0xff]
    %v318 = vld [vmem:[#allocation8 + $0x178] sm:$0xff]
    %v319 = vld [vmem:[#allocation8 + $0x180] sm:$0xff]
    %v320 = vld [vmem:[#allocation8 + $0x188] sm:$0xff]
    %v321 = vld [vmem:[#allocation8 + $0x190] sm:$0xff]
    %v322 = vld [vmem:[#allocation8 + $0x198] sm:$0xff]
    %v323 = vld [vmem:[#allocation8 + $0x1a0] sm:$0xff]
    %v324 = vld [vmem:[#allocation8 + $0x1a8] sm:$0xff]
    %v325 = vld [vmem:[#allocation8 + $0x1b0] sm:$0xff]
    %v326 = vld [vmem:[#allocation8 + $0x1b8] sm:$0xff]
    %v327 = vld [vmem:[#allocation8 + $0x1c0] sm:$0xff]
    %v328 = vld [vmem:[#allocation8 + $0x1c8] sm:$0xff]
    %v329 = vld [vmem:[#allocation8 + $0x1d0] sm:$0xff]
    %v330 = vld [vmem:[#allocation8 + $0x1d8] sm:$0xff]
    %v331 = vld [vmem:[#allocation8 + $0x1e0] sm:$0xff]
    %v332 = vld [vmem:[#allocation8 + $0x1e8] sm:$0xff]
    %v333 = vld [vmem:[#allocation8 + $0x1f0] sm:$0xff]
    %v334 = vld [vmem:[#allocation8 + $0x1f8] sm:$0xff]
    %v335 = vld [vmem:[%s4] sm:$0x3]
    %v337 = vperm.slane %v335, 0
    %v338 = vperm.slane %v335, 1
    %341 = vmatpush.msra.mxu0 %v301
    %342 = vmatpush.msra.mxu0 %v299
    %343 = vmatpush.msra.mxu0 %v297
    %344 = vmatpush.msra.mxu0 %v295
    %345 = vmatpush.msra.mxu0 %v293
    %346 = vmatpush.msra.mxu0 %v291
    %347 = vmatpush.msra.mxu0 %v289
    %348 = vmatpush.msra.mxu0 %v287
    %349 = vmatpush.msra.mxu0 %v285
    %350 = vmatpush.msra.mxu0 %v283
    %351 = vmatpush.msra.mxu0 %v281
    %352 = vmatpush.msra.mxu0 %v279
    %353 = vmatpush.msra.mxu0 %v277
    %354 = vmatpush.msra.mxu0 %v275
    %355 = vmatpush.msra.mxu0 %v273
    %356 = vmatpush.msra.mxu0 %v271
    %357 = vmatmul.f32.gmra.mxu0 %v267
    %v358 = vpop.f32.mrf.mxu0
    %v359 = vadd.f32 %v337, %v358
    %360 = vmatmul.f32.gmra.mxu0 %v269
    %v361 = vpop.f32.mrf.mxu0
    %v362 = vadd.f32 %v337, %v361
    %363 = vdwg.mxu0
    %364 = vmatpush.msra.mxu0 %v333
    %365 = vmatpush.msra.mxu0 %v331
    %366 = vmatpush.msra.mxu0 %v329
    %367 = vmatpush.msra.mxu0 %v327
    %368 = vmatpush.msra.mxu0 %v325
    %369 = vmatpush.msra.mxu0 %v323
    %370 = vmatpush.msra.mxu0 %v321
    %371 = vmatpush.msra.mxu0 %v319
    %372 = vmatpush.msra.mxu0 %v317
    %373 = vmatpush.msra.mxu0 %v315
    %374 = vmatpush.msra.mxu0 %v313
    %375 = vmatpush.msra.mxu0 %v311
    %376 = vmatpush.msra.mxu0 %v309
    %377 = vmatpush.msra.mxu0 %v307
    %378 = vmatpush.msra.mxu0 %v305
    %379 = vmatpush.msra.mxu0 %v303
    %380 = vmatmul.f32.gmra.mxu0 %v268
    %v381 = vpop.f32.mrf.mxu0
    %v382 = vadd.f32 %v359, %v381
    %383 = vmatmul.f32.gmra.mxu0 %v270
    %v384 = vpop.f32.mrf.mxu0
    %v385 = vadd.f32 %v362, %v384
    %386 = vdwg.mxu0
    %387 = vmatpush.msra.mxu0 %v302
    %388 = vmatpush.msra.mxu0 %v300
    %389 = vmatpush.msra.mxu0 %v298
    %390 = vmatpush.msra.mxu0 %v296
    %391 = vmatpush.msra.mxu0 %v294
    %392 = vmatpush.msra.mxu0 %v292
    %393 = vmatpush.msra.mxu0 %v290
    %394 = vmatpush.msra.mxu0 %v288
    %395 = vmatpush.msra.mxu0 %v286
    %396 = vmatpush.msra.mxu0 %v284
    %397 = vmatpush.msra.mxu0 %v282
    %398 = vmatpush.msra.mxu0 %v280
    %399 = vmatpush.msra.mxu0 %v278
    %400 = vmatpush.msra.mxu0 %v276
    %401 = vmatpush.msra.mxu0 %v274
    %402 = vmatpush.msra.mxu0 %v272
    %403 = vmatmul.f32.gmra.mxu0 %v267
    %v404 = vpop.f32.mrf.mxu0
    %v405 = vadd.f32 %v338, %v404
    %406 = vmatmul.f32.gmra.mxu0 %v269
    %v407 = vpop.f32.mrf.mxu0
    %v408 = vadd.f32 %v338, %v407
    %409 = vdwg.mxu0
    %410 = vmatpush.msra.mxu0 %v334
    %411 = vmatpush.msra.mxu0 %v332
    %412 = vmatpush.msra.mxu0 %v330
    %413 = vmatpush.msra.mxu0 %v328
    %414 = vmatpush.msra.mxu0 %v326
    %415 = vmatpush.msra.mxu0 %v324
    %416 = vmatpush.msra.mxu0 %v322
    %417 = vmatpush.msra.mxu0 %v320
    %418 = vmatpush.msra.mxu0 %v318
    %419 = vmatpush.msra.mxu0 %v316
    %420 = vmatpush.msra.mxu0 %v314
    %421 = vmatpush.msra.mxu0 %v312
    %422 = vmatpush.msra.mxu0 %v310
    %423 = vmatpush.msra.mxu0 %v308
    %424 = vmatpush.msra.mxu0 %v306
    %425 = vmatpush.msra.mxu0 %v304
    %426 = vmatmul.f32.gmra.mxu0 %v268
    %v427 = vpop.f32.mrf.mxu0
    %v428 = vadd.f32 %v405, %v427
    %429 = vmatmul.f32.gmra.mxu0 %v270
    %v430 = vpop.f32.mrf.mxu0
    %v431 = vadd.f32 %v408, %v430
    %432 = vdwg.mxu0
    %v433 = vadd.f32 %v382, %v428
    %434 = vadd.xlane.f32.xlu0 %v433
    %v435 = vpop.xlane.xlu0 %434
    %v436 = vadd.f32 %v385, %v431
    %437 = vadd.xlane.f32.xlu0 %v436
    %v438 = vpop.xlane.xlu0 %437
    %v439 = vrcp.pop 256.0
    %v440 = vmul.f32 256.0, %v439
    %v441 = vsub.f32 1.0, %v440
    %v442 = vmul.f32 %v439, %v441
    %v443 = vadd.f32 %v439, %v442
    %vm444 = vweird.f32 %v439
    %v445 = vsel %vm444, %v439, %v443
    %v446 = vmul.f32 %v435, %v445
    %v447 = vmul.f32 %v438, %v445
    %v448 = vsub.f32 %v382, %v446
    %v449 = vsub.f32 %v428, %v446
    %v450 = vsub.f32 %v385, %v447
    %v451 = vsub.f32 %v431, %v447
    %v452 = vmul.f32 %v448, %v448
    %v453 = vmul.f32 %v449, %v449
    %v454 = vmul.f32 %v450, %v450
    %v455 = vmul.f32 %v451, %v451
    %v456 = vadd.f32 %v452, %v453
    %457 = vadd.xlane.f32.xlu0 %v456
    %v458 = vpop.xlane.xlu0 %457
    %v459 = vadd.f32 %v454, %v455
    %460 = vadd.xlane.f32.xlu0 %v459
    %v461 = vpop.xlane.xlu0 %460
    %v462 = vmul.f32 %v458, %v445
    %v463 = vmul.f32 %v461, %v445
    %v464 = vadd.f32 %v462, 1e-05
    %v465 = vadd.f32 %v463, 1e-05
    %v466 = vrsqrt.pop %v464
    %v467 = vmul.f32 %v466, %v464
    %v468 = vmul.f32 %v467, %v466
    %v469 = vmul.f32 0.5, %v468
    %v470 = vsub.f32 1.5, %v469
    %v471 = vmul.f32 %v466, %v470
    %vm472 = vweird.f32 %v464
    %vm473 = vweird.f32 %v466
    %vm474 = vmor %vm472, %vm473
    %v475 = vsel %vm474, %v466, %v471
    %v476 = vrsqrt.pop %v465
    %v477 = vmul.f32 %v476, %v465
    %v478 = vmul.f32 %v477, %v476
    %v479 = vmul.f32 0.5, %v478
    %v480 = vsub.f32 1.5, %v479
    %v481 = vmul.f32 %v476, %v480
    %vm482 = vweird.f32 %v465
    %vm483 = vweird.f32 %v476
    %vm484 = vmor %vm482, %vm483
    %v485 = vsel %vm484, %v476, %v481
    %v486 = vmul.f32 %v448, %v475
    %v487 = vmul.f32 %v449, %v475
    %v488 = vmul.f32 %v450, %v485
    %v489 = vmul.f32 %v451, %v485
    %v490 = vld [vmem:[%s5] sm:$0x3]
    %v492 = vperm.slane %v490, 0
    %v493 = vperm.slane %v490, 1
    %v496 = vmul.f32 %v486, %v492
    %v497 = vmul.f32 %v487, %v493
    %v498 = vmul.f32 %v488, %v492
    %v499 = vmul.f32 %v489, %v493
    %v500 = vld [vmem:[#allocation10] sm:$0x3]
    %v502 = vperm.slane %v500, 0
    %v503 = vperm.slane %v500, 1
    %v506 = vadd.f32 %v496, %v502
    %v507 = vadd.f32 %v497, %v503
    %v508 = vadd.f32 %v498, %v502
    %v509 = vadd.f32 %v499, %v503
    %510 = vst [vmem:[#allocation11] sm:$0xff] %v506
    %511 = vst [vmem:[#allocation11 + $0x8] sm:$0xff] %v507
    %512 = vst [vmem:[#allocation11 + $0x10] sm:$0xff] %v508
    %513 = vst [vmem:[#allocation11 + $0x18] sm:$0xff] %v509
    // Predicated region
    $region50: #{tpu_custom_call.1} parent=1 // pred_check
      _
    $region51: #{tpu_custom_call.1} parent=1 // pred_check_branch
      %515 = sbr.rel (0) target = $region53
    $region52: #{tpu_custom_call.1} parent=1 // pred_region
      %517 = vsyncadd [#allocation4], 0
      %s518 = sshll.u32 [#allocation11], 4
      %s519 = int_to_ptr.vmem [resolvable:$true] %s518
      %s520 = sshll.u32 %s7, 4
      %s521 = int_to_ptr.hbm [resolvable:$true] %s520
      %526 = dma.vmem_to_hbm [thread:$0]  %s519, 512, %s521, [#allocation4], 256, 256, 16
    $region53: #{tpu_custom_call.1} parent=1 // pred_fallthru
      _
    // Predicated region
    $region54: #{tpu_custom_call.1} parent=1 // pred_check
      _
    $region55: #{tpu_custom_call.1} parent=1 // pred_check_branch
      %528 = sbr.rel (0) target = $region57
    $region56: #{tpu_custom_call.1} parent=1 // pred_region
      %530 = dma.done [#allocation4], 512
    $region57: #{tpu_custom_call.1} parent=1 // pred_fallthru
      _
    %531 = vsyncpa [#allocation3], 1
    %532 = vsyncpa [#allocation6], 1
    %533 = vsyncpa [#allocation9], 1
    %534 = vsyncpa [#allocation4], 1

</llo_original>
